<compile_context>
chip_gen: v7x
topology: tpu7x:2x2x1
jax: 0.10.0
libtpu: 0.0.40
codegen_flags: <defaults>
</compile_context>

<pallas_src>
import functools

import jax
import jax.numpy as jnp
from jax.experimental import pallas as pl
from jax.experimental.pallas import tpu as pltpu


# ----------------------------------------------------------------------------
# Fused Pallas kernel: all LSTM layers + fc head in one invocation
# ----------------------------------------------------------------------------
def _fused_lstm_angle_kernel(x_ref, angle_ref, *rest, num_layers, hidden_size):
    """rest = [w_ih_t, w_hh_t, b] * num_layers + [w_h, w_a, b_fc]
              + [out_ref] + [hseq_scratch].

    x_ref:     (T*B, D_in)  time-major flattened, bf16 (matmul LHS only)
    angle_ref: (B, 4)       f32
    out_ref:   (B, O)       f32
    hseq_ref:  (T*B, H)     bf16 VMEM scratch (per-layer output sequence)
    """
    layer_refs = rest[: 3 * num_layers]
    w_h_ref, w_a_ref, b_fc_ref, out_ref, hseq_ref = rest[3 * num_layers:]

    H = hidden_size
    B = angle_ref.shape[0]
    T = x_ref.shape[0] // B

    # Constant lane masks, hoisted out of all loops.  PyTorch gate order is
    # [i, f, g, o]; only the g chunk is tanh, the rest are sigmoid, and
    # sigmoid(x) = 0.5 * (1 + tanh(x / 2)) lets us use ONE tanh over the whole
    # (B, 4H) gates vreg per step.
    lane = jax.lax.broadcasted_iota(jnp.int32, (B, 4 * H), 1)
    is_g = (lane >= 2 * H) & (lane < 3 * H)
    pre_scale = jnp.where(is_g, jnp.float32(1.0), jnp.float32(0.5))

    h = None
    for l in range(num_layers):
        w_ih = layer_refs[3 * l][...]        # (D_l, 4H) bf16
        w_hh = layer_refs[3 * l + 1][...]    # (H, 4H)   bf16
        b = layer_refs[3 * l + 2][...]       # (1, 4H)   f32

        x_in = x_ref[...] if l == 0 else hseq_ref[...]   # (T*B, D_l) bf16

        # Batched non-recurrent projection: one MXU push covers every
        # timestep of this layer; the bias is added once here, not per step.
        xproj = jnp.dot(x_in, w_ih, preferred_element_type=jnp.float32) + b

        h = jnp.zeros((B, H), jnp.float32)
        c = jnp.zeros((B, H), jnp.float32)
        last_layer = l == num_layers - 1
        for t in range(T):  # static unroll; only h/c are live across steps
            gates = xproj[t * B:(t + 1) * B, :] + jnp.dot(
                h.astype(jnp.bfloat16), w_hh,
                preferred_element_type=jnp.float32)          # (B, 4H) f32
            y = jnp.tanh(gates * pre_scale)                  # single EUP push
            act = jnp.where(is_g, y, 0.5 * y + 0.5)          # i/f/o->sigmoid, g->tanh
            i_g = act[:, 0 * H:1 * H]
            f_g = act[:, 1 * H:2 * H]
            g_g = act[:, 2 * H:3 * H]
            o_g = act[:, 3 * H:4 * H]
            c = f_g * c + i_g * g_g
            h = o_g * jnp.tanh(c)
            if not last_layer:
                # Feed next layer's batched input projection via VMEM scratch.
                hseq_ref[t * B:(t + 1) * B, :] = h.astype(jnp.bfloat16)
        # NOTE: holding w_hh in the MXU across steps (pltpu.matmul_push_rhs /
        # matmul_acc_lhs) is a possible further micro-opt; measure before use.

    # fc(concat(h_last, angle)) == h_last @ W_h + angle @ W_a + b_fc
    out_ref[...] = (
        jnp.dot(h.astype(jnp.bfloat16), w_h_ref[...],
                preferred_element_type=jnp.float32)
        + jnp.dot(angle_ref[...].astype(jnp.bfloat16), w_a_ref[...],
                  preferred_element_type=jnp.float32)
        + b_fc_ref[...]
    )


# ----------------------------------------------------------------------------
# Wrapper
# ----------------------------------------------------------------------------
def lstm_with_angle_forward(params, x, angle):
    """Forward pass of LSTMwithAngle.

    x: (B, T, input_size)  [batch_first, like PyTorch]
    angle: (B, 4)
    Returns logits: (B, output_size), float32.
    """
    x = x.astype(jnp.float32)
    angle = angle.astype(jnp.float32)
    B, T, D = x.shape
    layers = params["lstm"]
    num_layers = len(layers)
    H = layers[0]["w_hh_t"].shape[0]
    O = params["fc"]["w_h"].shape[1]

    # Time-major, flattened to (T*B, D): the whole-sequence input projection
    # becomes one batched matmul per layer.  The transpose of this tiny array
    # is essentially free in XLA; the serialized per-step matmuls it removes
    # from the in-kernel recurrence are not.
    x_tm = jnp.transpose(x, (1, 0, 2)).reshape(T * B, D).astype(jnp.bfloat16)

    flat_layer_args = []
    for layer in layers:
        flat_layer_args += [
            layer["w_ih_t"].astype(jnp.bfloat16),    # (D_l, 4H)
            layer["w_hh_t"].astype(jnp.bfloat16),    # (H, 4H)
            layer["b"].astype(jnp.float32),          # (1, 4H)
        ]
    fc = params["fc"]
    inputs = [
        x_tm, angle, *flat_layer_args,
        fc["w_h"].astype(jnp.bfloat16),              # (H, O)
        fc["w_a"].astype(jnp.bfloat16),              # (4, O)
        fc["b"].astype(jnp.float32),                 # (1, O)
    ]

    kernel = functools.partial(
        _fused_lstm_angle_kernel, num_layers=num_layers, hidden_size=H)

    return pl.pallas_call(
        kernel,
        out_shape=jax.ShapeDtypeStruct((B, O), jnp.float32),
        # Whole-array VMEM blocks: total resident footprint is tens of KiB,
        # far below any generation's VMEM (incl. v7x's 64 MiB), so no
        # tiling / pipelining and no grid (B=2: single TensorCore is fine).
        in_specs=[pl.BlockSpec(memory_space=pltpu.MemorySpace.VMEM)] * len(inputs),
        out_specs=pl.BlockSpec(memory_space=pltpu.MemorySpace.VMEM),
        scratch_shapes=[pltpu.VMEM((T * B, H), jnp.bfloat16)],
    )(*inputs)


# ----------------------------------------------------------------------------
# Deterministic parameter init (matches PyTorch nn.LSTM / nn.Linear shapes)
# ----------------------------------------------------------------------------
def init_params(key, input_size, hidden_size, num_layers, output_size):
    H = hidden_size
    stdv = 1.0 / jnp.sqrt(jnp.float32(H))
    layers = []
    for l in range(num_layers):
        d_in = input_size if l == 0 else H
        key, k1, k2, k3, k4 = jax.random.split(key, 5)
        w_ih = jax.random.uniform(k1, (4 * H, d_in), jnp.float32, -stdv, stdv)
        w_hh = jax.random.uniform(k2, (4 * H, H), jnp.float32, -stdv, stdv)
        b_ih = jax.random.uniform(k3, (4 * H,), jnp.float32, -stdv, stdv)
        b_hh = jax.random.uniform(k4, (4 * H,), jnp.float32, -stdv, stdv)
        layers.append({
            "w_ih_t": w_ih.T,                 # (d_in, 4H)
            "w_hh_t": w_hh.T,                 # (H, 4H)
            "b": (b_ih + b_hh)[None, :],      # (1, 4H)
        })
    key, k1, k2 = jax.random.split(key, 3)
    fc_in = H + 4
    stdv_fc = 1.0 / jnp.sqrt(jnp.float32(fc_in))
    w_fc = jax.random.uniform(k1, (output_size, fc_in), jnp.float32, -stdv_fc, stdv_fc)
    b_fc = jax.random.uniform(k2, (output_size,), jnp.float32, -stdv_fc, stdv_fc)
    return {
        "lstm": layers,
        "fc": {
            "w_h": w_fc[:, :H].T,             # (H, O)
            "w_a": w_fc[:, H:].T,             # (4, O)
            "b": b_fc[None, :],               # (1, O)
        },
    }


# ----------------------------------------------------------------------------
# Pure-JAX reference.  matmul_dtype selects the matmul-operand dtype
# (elementwise math stays f32), mirroring the kernel's bf16-MXU strategy.
# ----------------------------------------------------------------------------
def reference_forward(params, x, angle, matmul_dtype=jnp.float32):
    def mm(a, b):
        return jnp.dot(a.astype(matmul_dtype), b.astype(matmul_dtype),
                       preferred_element_type=jnp.float32)

    x = x.astype(jnp.float32)
    B, T, D = x.shape
    x_in = jnp.transpose(x, (1, 0, 2)).reshape(T * B, D)   # time-major
    outs = None
    for layer in params["lstm"]:
        H = layer["w_hh_t"].shape[0]
        xproj = mm(x_in, layer["w_ih_t"]) + layer["b"]      # (T*B, 4H)
        h = jnp.zeros((B, H), jnp.float32)
        c = jnp.zeros((B, H), jnp.float32)
        outs = []
        for t in range(T):
            gates = xproj[t * B:(t + 1) * B] + mm(h, layer["w_hh_t"])
            i_g = jax.nn.sigmoid(gates[:, 0 * H:1 * H])
            f_g = jax.nn.sigmoid(gates[:, 1 * H:2 * H])
            g_g = jnp.tanh(gates[:, 2 * H:3 * H])
            o_g = jax.nn.sigmoid(gates[:, 3 * H:4 * H])
            c = f_g * c + i_g * g_g
            h = o_g * jnp.tanh(c)
            outs.append(h)
        x_in = jnp.concatenate(outs, axis=0)                # (T*B, H)
    h_last = outs[-1]
    fc = params["fc"]
    return (mm(h_last, fc["w_h"]) + mm(angle.astype(jnp.float32), fc["w_a"])
            + fc["b"])


# ----------------------------------------------------------------------------
if __name__ == "__main__":
    input_size = 16
    hidden_size = 32
    num_layers = 2
    output_size = 8
    B, T = 2, 8

    key = jax.random.PRNGKey(0)
    key, kx, ka, kp = jax.random.split(key, 4)
    x = jax.random.normal(kx, (B, T, input_size), jnp.float32)
    angle = jax.random.normal(ka, (B, 4), jnp.float32)
    params = init_params(kp, input_size, hidden_size, num_layers, output_size)

    out = lstm_with_angle_forward(params, x, angle)
    out = jax.block_until_ready(out)
    assert out.shape == (B, output_size)
    assert bool(jnp.all(jnp.isfinite(out))), "non-finite output"

    # Precision-matched reference (bf16 matmul operands, f32 elsewhere):
    ref_bf16 = reference_forward(params, x, angle, matmul_dtype=jnp.bfloat16)
    assert jnp.allclose(out, ref_bf16, rtol=2e-3, atol=2e-3), \
        "mismatch vs bf16-matmul reference"

    # Full-f32 reference: loose tolerance accounts for bf16 MXU operands.
    ref_f32 = reference_forward(params, x, angle, matmul_dtype=jnp.float32)
    assert jnp.allclose(out, ref_f32, rtol=1e-1, atol=1e-1), \
        "mismatch vs f32 reference"

    print("KERNEL_OK")
</pallas_src>

<mosaic_0001>
module attributes {stable_mosaic.version = 11 : i64} {
  func.func @_fused_lstm_angle_kernel(%arg0: memref<16x16xbf16, #tpu.memory_space<vmem>>, %arg1: memref<2x4xf32, #tpu.memory_space<vmem>>, %arg2: memref<16x128xbf16, #tpu.memory_space<vmem>>, %arg3: memref<32x128xbf16, #tpu.memory_space<vmem>>, %arg4: memref<1x128xf32, #tpu.memory_space<vmem>>, %arg5: memref<32x128xbf16, #tpu.memory_space<vmem>>, %arg6: memref<32x128xbf16, #tpu.memory_space<vmem>>, %arg7: memref<1x128xf32, #tpu.memory_space<vmem>>, %arg8: memref<32x8xbf16, #tpu.memory_space<vmem>>, %arg9: memref<4x8xbf16, #tpu.memory_space<vmem>>, %arg10: memref<1x8xf32, #tpu.memory_space<vmem>>, %arg11: memref<2x8xf32, #tpu.memory_space<vmem>>, %arg12: memref<16x32xbf16, #tpu.memory_space<vmem>>) attributes {dimension_semantics = [], scalar_prefetch = 0 : i64, scratch_operands = 1 : i64, tpu.core_type = #tpu.core_type<tc>} {
    %0 = tpu.iota {dimensions = array<i32: 1>} : vector<2x128xi32>
    %c64_i32 = arith.constant 64 : i32
    %1 = vector.broadcast %c64_i32 : i32 to vector<2x128xi32>
    %2 = arith.cmpi sge, %0, %1 : vector<2x128xi32>
    %c96_i32 = arith.constant 96 : i32
    %3 = vector.broadcast %c96_i32 : i32 to vector<2x128xi32>
    %4 = arith.cmpi slt, %0, %3 : vector<2x128xi32>
    %5 = arith.andi %2, %4 : vector<2x128xi1>
    %cst = arith.constant 1.000000e+00 : f32
    %cst_0 = arith.constant 5.000000e-01 : f32
    %6 = vector.broadcast %cst : f32 to vector<2x128xf32>
    %7 = vector.broadcast %cst_0 : f32 to vector<2x128xf32>
    %8 = arith.select %5, %6, %7 : vector<2x128xi1>, vector<2x128xf32>
    %c0 = arith.constant 0 : index
    %c0_1 = arith.constant 0 : index
    %9 = vector.load %arg2[%c0, %c0_1] : memref<16x128xbf16, #tpu.memory_space<vmem>>, vector<16x128xbf16>
    %c0_2 = arith.constant 0 : index
    %c0_3 = arith.constant 0 : index
    %10 = vector.load %arg3[%c0_2, %c0_3] : memref<32x128xbf16, #tpu.memory_space<vmem>>, vector<32x128xbf16>
    %c0_4 = arith.constant 0 : index
    %c0_5 = arith.constant 0 : index
    %11 = vector.load %arg4[%c0_4, %c0_5] : memref<1x128xf32, #tpu.memory_space<vmem>>, vector<1x128xf32>
    %c0_6 = arith.constant 0 : index
    %c0_7 = arith.constant 0 : index
    %12 = vector.load %arg0[%c0_6, %c0_7] : memref<16x16xbf16, #tpu.memory_space<vmem>>, vector<16x16xbf16>
    %cst_8 = arith.constant dense<0.000000e+00> : vector<16x128xf32>
    %13 = tpu.matmul %12, %9, %cst_8 {dimension_numbers = #tpu.dot_dimension_numbers<[1], [0], [0], [1], [0, 0, 1, 1], [], []>} : vector<16x16xbf16>, vector<16x128xbf16>, vector<16x128xf32> -> vector<16x128xf32>
    %14 = vector.broadcast %11 : vector<1x128xf32> to vector<16x128xf32>
    %15 = arith.addf %13, %14 : vector<16x128xf32>
    %cst_9 = arith.constant 0.000000e+00 : f32
    %16 = vector.broadcast %cst_9 : f32 to vector<2x32xf32>
    %cst_10 = arith.constant 0.000000e+00 : f32
    %17 = vector.broadcast %cst_10 : f32 to vector<2x32xf32>
    %18 = vector.extract_strided_slice %15 {offsets = [0, 0], sizes = [2, 128], strides = [1, 1]} : vector<16x128xf32> to vector<2x128xf32>
    %19 = arith.truncf %16 : vector<2x32xf32> to vector<2x32xbf16>
    %cst_11 = arith.constant dense<0.000000e+00> : vector<2x128xf32>
    %20 = tpu.matmul %19, %10, %cst_11 {dimension_numbers = #tpu.dot_dimension_numbers<[1], [0], [0], [1], [0, 0, 1, 1], [], []>} : vector<2x32xbf16>, vector<32x128xbf16>, vector<2x128xf32> -> vector<2x128xf32>
    %21 = arith.addf %18, %20 : vector<2x128xf32>
    %22 = arith.mulf %21, %8 : vector<2x128xf32>
    %23 = math.tanh %22 : vector<2x128xf32>
    %cst_12 = arith.constant 5.000000e-01 : f32
    %24 = vector.broadcast %cst_12 : f32 to vector<2x128xf32>
    %25 = arith.mulf %24, %23 : vector<2x128xf32>
    %cst_13 = arith.constant 5.000000e-01 : f32
    %26 = vector.broadcast %cst_13 : f32 to vector<2x128xf32>
    %27 = arith.addf %25, %26 : vector<2x128xf32>
    %28 = arith.select %5, %23, %27 : vector<2x128xi1>, vector<2x128xf32>
    %29 = vector.extract_strided_slice %28 {offsets = [0, 0], sizes = [2, 32], strides = [1, 1]} : vector<2x128xf32> to vector<2x32xf32>
    %30 = vector.extract_strided_slice %28 {offsets = [0, 32], sizes = [2, 32], strides = [1, 1]} : vector<2x128xf32> to vector<2x32xf32>
    %31 = vector.extract_strided_slice %28 {offsets = [0, 64], sizes = [2, 32], strides = [1, 1]} : vector<2x128xf32> to vector<2x32xf32>
    %32 = vector.extract_strided_slice %28 {offsets = [0, 96], sizes = [2, 32], strides = [1, 1]} : vector<2x128xf32> to vector<2x32xf32>
    %33 = arith.mulf %30, %17 : vector<2x32xf32>
    %34 = arith.mulf %29, %31 : vector<2x32xf32>
    %35 = arith.addf %33, %34 : vector<2x32xf32>
    %36 = math.tanh %35 : vector<2x32xf32>
    %37 = arith.mulf %32, %36 : vector<2x32xf32>
    %38 = arith.truncf %37 : vector<2x32xf32> to vector<2x32xbf16>
    %c0_14 = arith.constant 0 : index
    %c0_15 = arith.constant 0 : index
    %39 = vector.load %arg12[%c0_14, %c0_15] : memref<16x32xbf16, #tpu.memory_space<vmem>>, vector<2x32xbf16>
    tpu.vector_store %arg12[%c0_14, %c0_15], %38 {strides = array<i32>} : memref<16x32xbf16, #tpu.memory_space<vmem>>, vector<2x32xbf16>,
    %40 = vector.extract_strided_slice %15 {offsets = [2, 0], sizes = [2, 128], strides = [1, 1]} : vector<16x128xf32> to vector<2x128xf32>
    %41 = arith.truncf %37 : vector<2x32xf32> to vector<2x32xbf16>
    %cst_16 = arith.constant dense<0.000000e+00> : vector<2x128xf32>
    %42 = tpu.matmul %41, %10, %cst_16 {dimension_numbers = #tpu.dot_dimension_numbers<[1], [0], [0], [1], [0, 0, 1, 1], [], []>} : vector<2x32xbf16>, vector<32x128xbf16>, vector<2x128xf32> -> vector<2x128xf32>
    %43 = arith.addf %40, %42 : vector<2x128xf32>
    %44 = arith.mulf %43, %8 : vector<2x128xf32>
    %45 = math.tanh %44 : vector<2x128xf32>
    %cst_17 = arith.constant 5.000000e-01 : f32
    %46 = vector.broadcast %cst_17 : f32 to vector<2x128xf32>
    %47 = arith.mulf %46, %45 : vector<2x128xf32>
    %cst_18 = arith.constant 5.000000e-01 : f32
    %48 = vector.broadcast %cst_18 : f32 to vector<2x128xf32>
    %49 = arith.addf %47, %48 : vector<2x128xf32>
    %50 = arith.select %5, %45, %49 : vector<2x128xi1>, vector<2x128xf32>
    %51 = vector.extract_strided_slice %50 {offsets = [0, 0], sizes = [2, 32], strides = [1, 1]} : vector<2x128xf32> to vector<2x32xf32>
    %52 = vector.extract_strided_slice %50 {offsets = [0, 32], sizes = [2, 32], strides = [1, 1]} : vector<2x128xf32> to vector<2x32xf32>
    %53 = vector.extract_strided_slice %50 {offsets = [0, 64], sizes = [2, 32], strides = [1, 1]} : vector<2x128xf32> to vector<2x32xf32>
    %54 = vector.extract_strided_slice %50 {offsets = [0, 96], sizes = [2, 32], strides = [1, 1]} : vector<2x128xf32> to vector<2x32xf32>
    %55 = arith.mulf %52, %35 : vector<2x32xf32>
    %56 = arith.mulf %51, %53 : vector<2x32xf32>
    %57 = arith.addf %55, %56 : vector<2x32xf32>
    %58 = math.tanh %57 : vector<2x32xf32>
    %59 = arith.mulf %54, %58 : vector<2x32xf32>
    %60 = arith.truncf %59 : vector<2x32xf32> to vector<2x32xbf16>
    %c2 = arith.constant 2 : index
    %c0_19 = arith.constant 0 : index
    %61 = vector.load %arg12[%c2, %c0_19] : memref<16x32xbf16, #tpu.memory_space<vmem>>, vector<2x32xbf16>
    tpu.vector_store %arg12[%c2, %c0_19], %60 {strides = array<i32>} : memref<16x32xbf16, #tpu.memory_space<vmem>>, vector<2x32xbf16>,
    %62 = vector.extract_strided_slice %15 {offsets = [4, 0], sizes = [2, 128], strides = [1, 1]} : vector<16x128xf32> to vector<2x128xf32>
    %63 = arith.truncf %59 : vector<2x32xf32> to vector<2x32xbf16>
    %cst_20 = arith.constant dense<0.000000e+00> : vector<2x128xf32>
    %64 = tpu.matmul %63, %10, %cst_20 {dimension_numbers = #tpu.dot_dimension_numbers<[1], [0], [0], [1], [0, 0, 1, 1], [], []>} : vector<2x32xbf16>, vector<32x128xbf16>, vector<2x128xf32> -> vector<2x128xf32>
    %65 = arith.addf %62, %64 : vector<2x128xf32>
    %66 = arith.mulf %65, %8 : vector<2x128xf32>
    %67 = math.tanh %66 : vector<2x128xf32>
    %cst_21 = arith.constant 5.000000e-01 : f32
    %68 = vector.broadcast %cst_21 : f32 to vector<2x128xf32>
    %69 = arith.mulf %68, %67 : vector<2x128xf32>
    %cst_22 = arith.constant 5.000000e-01 : f32
    %70 = vector.broadcast %cst_22 : f32 to vector<2x128xf32>
    %71 = arith.addf %69, %70 : vector<2x128xf32>
    %72 = arith.select %5, %67, %71 : vector<2x128xi1>, vector<2x128xf32>
    %73 = vector.extract_strided_slice %72 {offsets = [0, 0], sizes = [2, 32], strides = [1, 1]} : vector<2x128xf32> to vector<2x32xf32>
    %74 = vector.extract_strided_slice %72 {offsets = [0, 32], sizes = [2, 32], strides = [1, 1]} : vector<2x128xf32> to vector<2x32xf32>
    %75 = vector.extract_strided_slice %72 {offsets = [0, 64], sizes = [2, 32], strides = [1, 1]} : vector<2x128xf32> to vector<2x32xf32>
    %76 = vector.extract_strided_slice %72 {offsets = [0, 96], sizes = [2, 32], strides = [1, 1]} : vector<2x128xf32> to vector<2x32xf32>
    %77 = arith.mulf %74, %57 : vector<2x32xf32>
    %78 = arith.mulf %73, %75 : vector<2x32xf32>
    %79 = arith.addf %77, %78 : vector<2x32xf32>
    %80 = math.tanh %79 : vector<2x32xf32>
    %81 = arith.mulf %76, %80 : vector<2x32xf32>
    %82 = arith.truncf %81 : vector<2x32xf32> to vector<2x32xbf16>
    %c4 = arith.constant 4 : index
    %c0_23 = arith.constant 0 : index
    %83 = vector.load %arg12[%c4, %c0_23] : memref<16x32xbf16, #tpu.memory_space<vmem>>, vector<2x32xbf16>
    tpu.vector_store %arg12[%c4, %c0_23], %82 {strides = array<i32>} : memref<16x32xbf16, #tpu.memory_space<vmem>>, vector<2x32xbf16>,
    %84 = vector.extract_strided_slice %15 {offsets = [6, 0], sizes = [2, 128], strides = [1, 1]} : vector<16x128xf32> to vector<2x128xf32>
    %85 = arith.truncf %81 : vector<2x32xf32> to vector<2x32xbf16>
    %cst_24 = arith.constant dense<0.000000e+00> : vector<2x128xf32>
    %86 = tpu.matmul %85, %10, %cst_24 {dimension_numbers = #tpu.dot_dimension_numbers<[1], [0], [0], [1], [0, 0, 1, 1], [], []>} : vector<2x32xbf16>, vector<32x128xbf16>, vector<2x128xf32> -> vector<2x128xf32>
    %87 = arith.addf %84, %86 : vector<2x128xf32>
    %88 = arith.mulf %87, %8 : vector<2x128xf32>
    %89 = math.tanh %88 : vector<2x128xf32>
    %cst_25 = arith.constant 5.000000e-01 : f32
    %90 = vector.broadcast %cst_25 : f32 to vector<2x128xf32>
    %91 = arith.mulf %90, %89 : vector<2x128xf32>
    %cst_26 = arith.constant 5.000000e-01 : f32
    %92 = vector.broadcast %cst_26 : f32 to vector<2x128xf32>
    %93 = arith.addf %91, %92 : vector<2x128xf32>
    %94 = arith.select %5, %89, %93 : vector<2x128xi1>, vector<2x128xf32>
    %95 = vector.extract_strided_slice %94 {offsets = [0, 0], sizes = [2, 32], strides = [1, 1]} : vector<2x128xf32> to vector<2x32xf32>
    %96 = vector.extract_strided_slice %94 {offsets = [0, 32], sizes = [2, 32], strides = [1, 1]} : vector<2x128xf32> to vector<2x32xf32>
    %97 = vector.extract_strided_slice %94 {offsets = [0, 64], sizes = [2, 32], strides = [1, 1]} : vector<2x128xf32> to vector<2x32xf32>
    %98 = vector.extract_strided_slice %94 {offsets = [0, 96], sizes = [2, 32], strides = [1, 1]} : vector<2x128xf32> to vector<2x32xf32>
    %99 = arith.mulf %96, %79 : vector<2x32xf32>
    %100 = arith.mulf %95, %97 : vector<2x32xf32>
    %101 = arith.addf %99, %100 : vector<2x32xf32>
    %102 = math.tanh %101 : vector<2x32xf32>
    %103 = arith.mulf %98, %102 : vector<2x32xf32>
    %104 = arith.truncf %103 : vector<2x32xf32> to vector<2x32xbf16>
    %c6 = arith.constant 6 : index
    %c0_27 = arith.constant 0 : index
    %105 = vector.load %arg12[%c6, %c0_27] : memref<16x32xbf16, #tpu.memory_space<vmem>>, vector<2x32xbf16>
    tpu.vector_store %arg12[%c6, %c0_27], %104 {strides = array<i32>} : memref<16x32xbf16, #tpu.memory_space<vmem>>, vector<2x32xbf16>,
    %106 = vector.extract_strided_slice %15 {offsets = [8, 0], sizes = [2, 128], strides = [1, 1]} : vector<16x128xf32> to vector<2x128xf32>
    %107 = arith.truncf %103 : vector<2x32xf32> to vector<2x32xbf16>
    %cst_28 = arith.constant dense<0.000000e+00> : vector<2x128xf32>
    %108 = tpu.matmul %107, %10, %cst_28 {dimension_numbers = #tpu.dot_dimension_numbers<[1], [0], [0], [1], [0, 0, 1, 1], [], []>} : vector<2x32xbf16>, vector<32x128xbf16>, vector<2x128xf32> -> vector<2x128xf32>
    %109 = arith.addf %106, %108 : vector<2x128xf32>
    %110 = arith.mulf %109, %8 : vector<2x128xf32>
    %111 = math.tanh %110 : vector<2x128xf32>
    %cst_29 = arith.constant 5.000000e-01 : f32
    %112 = vector.broadcast %cst_29 : f32 to vector<2x128xf32>
    %113 = arith.mulf %112, %111 : vector<2x128xf32>
    %cst_30 = arith.constant 5.000000e-01 : f32
    %114 = vector.broadcast %cst_30 : f32 to vector<2x128xf32>
    %115 = arith.addf %113, %114 : vector<2x128xf32>
    %116 = arith.select %5, %111, %115 : vector<2x128xi1>, vector<2x128xf32>
    %117 = vector.extract_strided_slice %116 {offsets = [0, 0], sizes = [2, 32], strides = [1, 1]} : vector<2x128xf32> to vector<2x32xf32>
    %118 = vector.extract_strided_slice %116 {offsets = [0, 32], sizes = [2, 32], strides = [1, 1]} : vector<2x128xf32> to vector<2x32xf32>
    %119 = vector.extract_strided_slice %116 {offsets = [0, 64], sizes = [2, 32], strides = [1, 1]} : vector<2x128xf32> to vector<2x32xf32>
    %120 = vector.extract_strided_slice %116 {offsets = [0, 96], sizes = [2, 32], strides = [1, 1]} : vector<2x128xf32> to vector<2x32xf32>
    %121 = arith.mulf %118, %101 : vector<2x32xf32>
    %122 = arith.mulf %117, %119 : vector<2x32xf32>
    %123 = arith.addf %121, %122 : vector<2x32xf32>
    %124 = math.tanh %123 : vector<2x32xf32>
    %125 = arith.mulf %120, %124 : vector<2x32xf32>
    %126 = arith.truncf %125 : vector<2x32xf32> to vector<2x32xbf16>
    %c8 = arith.constant 8 : index
    %c0_31 = arith.constant 0 : index
    %127 = vector.load %arg12[%c8, %c0_31] : memref<16x32xbf16, #tpu.memory_space<vmem>>, vector<2x32xbf16>
    tpu.vector_store %arg12[%c8, %c0_31], %126 {strides = array<i32>} : memref<16x32xbf16, #tpu.memory_space<vmem>>, vector<2x32xbf16>,
    %128 = vector.extract_strided_slice %15 {offsets = [10, 0], sizes = [2, 128], strides = [1, 1]} : vector<16x128xf32> to vector<2x128xf32>
    %129 = arith.truncf %125 : vector<2x32xf32> to vector<2x32xbf16>
    %cst_32 = arith.constant dense<0.000000e+00> : vector<2x128xf32>
    %130 = tpu.matmul %129, %10, %cst_32 {dimension_numbers = #tpu.dot_dimension_numbers<[1], [0], [0], [1], [0, 0, 1, 1], [], []>} : vector<2x32xbf16>, vector<32x128xbf16>, vector<2x128xf32> -> vector<2x128xf32>
    %131 = arith.addf %128, %130 : vector<2x128xf32>
    %132 = arith.mulf %131, %8 : vector<2x128xf32>
    %133 = math.tanh %132 : vector<2x128xf32>
    %cst_33 = arith.constant 5.000000e-01 : f32
    %134 = vector.broadcast %cst_33 : f32 to vector<2x128xf32>
    %135 = arith.mulf %134, %133 : vector<2x128xf32>
    %cst_34 = arith.constant 5.000000e-01 : f32
    %136 = vector.broadcast %cst_34 : f32 to vector<2x128xf32>
    %137 = arith.addf %135, %136 : vector<2x128xf32>
    %138 = arith.select %5, %133, %137 : vector<2x128xi1>, vector<2x128xf32>
    %139 = vector.extract_strided_slice %138 {offsets = [0, 0], sizes = [2, 32], strides = [1, 1]} : vector<2x128xf32> to vector<2x32xf32>
    %140 = vector.extract_strided_slice %138 {offsets = [0, 32], sizes = [2, 32], strides = [1, 1]} : vector<2x128xf32> to vector<2x32xf32>
    %141 = vector.extract_strided_slice %138 {offsets = [0, 64], sizes = [2, 32], strides = [1, 1]} : vector<2x128xf32> to vector<2x32xf32>
    %142 = vector.extract_strided_slice %138 {offsets = [0, 96], sizes = [2, 32], strides = [1, 1]} : vector<2x128xf32> to vector<2x32xf32>
    %143 = arith.mulf %140, %123 : vector<2x32xf32>
    %144 = arith.mulf %139, %141 : vector<2x32xf32>
    %145 = arith.addf %143, %144 : vector<2x32xf32>
    %146 = math.tanh %145 : vector<2x32xf32>
    %147 = arith.mulf %142, %146 : vector<2x32xf32>
    %148 = arith.truncf %147 : vector<2x32xf32> to vector<2x32xbf16>
    %c10 = arith.constant 10 : index
    %c0_35 = arith.constant 0 : index
    %149 = vector.load %arg12[%c10, %c0_35] : memref<16x32xbf16, #tpu.memory_space<vmem>>, vector<2x32xbf16>
    tpu.vector_store %arg12[%c10, %c0_35], %148 {strides = array<i32>} : memref<16x32xbf16, #tpu.memory_space<vmem>>, vector<2x32xbf16>,
    %150 = vector.extract_strided_slice %15 {offsets = [12, 0], sizes = [2, 128], strides = [1, 1]} : vector<16x128xf32> to vector<2x128xf32>
    %151 = arith.truncf %147 : vector<2x32xf32> to vector<2x32xbf16>
    %cst_36 = arith.constant dense<0.000000e+00> : vector<2x128xf32>
    %152 = tpu.matmul %151, %10, %cst_36 {dimension_numbers = #tpu.dot_dimension_numbers<[1], [0], [0], [1], [0, 0, 1, 1], [], []>} : vector<2x32xbf16>, vector<32x128xbf16>, vector<2x128xf32> -> vector<2x128xf32>
    %153 = arith.addf %150, %152 : vector<2x128xf32>
    %154 = arith.mulf %153, %8 : vector<2x128xf32>
    %155 = math.tanh %154 : vector<2x128xf32>
    %cst_37 = arith.constant 5.000000e-01 : f32
    %156 = vector.broadcast %cst_37 : f32 to vector<2x128xf32>
    %157 = arith.mulf %156, %155 : vector<2x128xf32>
    %cst_38 = arith.constant 5.000000e-01 : f32
    %158 = vector.broadcast %cst_38 : f32 to vector<2x128xf32>
    %159 = arith.addf %157, %158 : vector<2x128xf32>
    %160 = arith.select %5, %155, %159 : vector<2x128xi1>, vector<2x128xf32>
    %161 = vector.extract_strided_slice %160 {offsets = [0, 0], sizes = [2, 32], strides = [1, 1]} : vector<2x128xf32> to vector<2x32xf32>
    %162 = vector.extract_strided_slice %160 {offsets = [0, 32], sizes = [2, 32], strides = [1, 1]} : vector<2x128xf32> to vector<2x32xf32>
    %163 = vector.extract_strided_slice %160 {offsets = [0, 64], sizes = [2, 32], strides = [1, 1]} : vector<2x128xf32> to vector<2x32xf32>
    %164 = vector.extract_strided_slice %160 {offsets = [0, 96], sizes = [2, 32], strides = [1, 1]} : vector<2x128xf32> to vector<2x32xf32>
    %165 = arith.mulf %162, %145 : vector<2x32xf32>
    %166 = arith.mulf %161, %163 : vector<2x32xf32>
    %167 = arith.addf %165, %166 : vector<2x32xf32>
    %168 = math.tanh %167 : vector<2x32xf32>
    %169 = arith.mulf %164, %168 : vector<2x32xf32>
    %170 = arith.truncf %169 : vector<2x32xf32> to vector<2x32xbf16>
    %c12 = arith.constant 12 : index
    %c0_39 = arith.constant 0 : index
    %171 = vector.load %arg12[%c12, %c0_39] : memref<16x32xbf16, #tpu.memory_space<vmem>>, vector<2x32xbf16>
    tpu.vector_store %arg12[%c12, %c0_39], %170 {strides = array<i32>} : memref<16x32xbf16, #tpu.memory_space<vmem>>, vector<2x32xbf16>,
    %172 = vector.extract_strided_slice %15 {offsets = [14, 0], sizes = [2, 128], strides = [1, 1]} : vector<16x128xf32> to vector<2x128xf32>
    %173 = arith.truncf %169 : vector<2x32xf32> to vector<2x32xbf16>
    %cst_40 = arith.constant dense<0.000000e+00> : vector<2x128xf32>
    %174 = tpu.matmul %173, %10, %cst_40 {dimension_numbers = #tpu.dot_dimension_numbers<[1], [0], [0], [1], [0, 0, 1, 1], [], []>} : vector<2x32xbf16>, vector<32x128xbf16>, vector<2x128xf32> -> vector<2x128xf32>
    %175 = arith.addf %172, %174 : vector<2x128xf32>
    %176 = arith.mulf %175, %8 : vector<2x128xf32>
    %177 = math.tanh %176 : vector<2x128xf32>
    %cst_41 = arith.constant 5.000000e-01 : f32
    %178 = vector.broadcast %cst_41 : f32 to vector<2x128xf32>
    %179 = arith.mulf %178, %177 : vector<2x128xf32>
    %cst_42 = arith.constant 5.000000e-01 : f32
    %180 = vector.broadcast %cst_42 : f32 to vector<2x128xf32>
    %181 = arith.addf %179, %180 : vector<2x128xf32>
    %182 = arith.select %5, %177, %181 : vector<2x128xi1>, vector<2x128xf32>
    %183 = vector.extract_strided_slice %182 {offsets = [0, 0], sizes = [2, 32], strides = [1, 1]} : vector<2x128xf32> to vector<2x32xf32>
    %184 = vector.extract_strided_slice %182 {offsets = [0, 32], sizes = [2, 32], strides = [1, 1]} : vector<2x128xf32> to vector<2x32xf32>
    %185 = vector.extract_strided_slice %182 {offsets = [0, 64], sizes = [2, 32], strides = [1, 1]} : vector<2x128xf32> to vector<2x32xf32>
    %186 = vector.extract_strided_slice %182 {offsets = [0, 96], sizes = [2, 32], strides = [1, 1]} : vector<2x128xf32> to vector<2x32xf32>
    %187 = arith.mulf %184, %167 : vector<2x32xf32>
    %188 = arith.mulf %183, %185 : vector<2x32xf32>
    %189 = arith.addf %187, %188 : vector<2x32xf32>
    %190 = math.tanh %189 : vector<2x32xf32>
    %191 = arith.mulf %186, %190 : vector<2x32xf32>
    %192 = arith.truncf %191 : vector<2x32xf32> to vector<2x32xbf16>
    %c14 = arith.constant 14 : index
    %c0_43 = arith.constant 0 : index
    %193 = vector.load %arg12[%c14, %c0_43] : memref<16x32xbf16, #tpu.memory_space<vmem>>, vector<2x32xbf16>
    tpu.vector_store %arg12[%c14, %c0_43], %192 {strides = array<i32>} : memref<16x32xbf16, #tpu.memory_space<vmem>>, vector<2x32xbf16>,
    %c0_44 = arith.constant 0 : index
    %c0_45 = arith.constant 0 : index
    %194 = vector.load %arg5[%c0_44, %c0_45] : memref<32x128xbf16, #tpu.memory_space<vmem>>, vector<32x128xbf16>
    %c0_46 = arith.constant 0 : index
    %c0_47 = arith.constant 0 : index
    %195 = vector.load %arg6[%c0_46, %c0_47] : memref<32x128xbf16, #tpu.memory_space<vmem>>, vector<32x128xbf16>
    %c0_48 = arith.constant 0 : index
    %c0_49 = arith.constant 0 : index
    %196 = vector.load %arg7[%c0_48, %c0_49] : memref<1x128xf32, #tpu.memory_space<vmem>>, vector<1x128xf32>
    %c0_50 = arith.constant 0 : index
    %c0_51 = arith.constant 0 : index
    %197 = vector.load %arg12[%c0_50, %c0_51] : memref<16x32xbf16, #tpu.memory_space<vmem>>, vector<16x32xbf16>
    %cst_52 = arith.constant dense<0.000000e+00> : vector<16x128xf32>
    %198 = tpu.matmul %197, %194, %cst_52 {dimension_numbers = #tpu.dot_dimension_numbers<[1], [0], [0], [1], [0, 0, 1, 1], [], []>} : vector<16x32xbf16>, vector<32x128xbf16>, vector<16x128xf32> -> vector<16x128xf32>
    %199 = vector.broadcast %196 : vector<1x128xf32> to vector<16x128xf32>
    %200 = arith.addf %198, %199 : vector<16x128xf32>
    %cst_53 = arith.constant 0.000000e+00 : f32
    %201 = vector.broadcast %cst_53 : f32 to vector<2x32xf32>
    %cst_54 = arith.constant 0.000000e+00 : f32
    %202 = vector.broadcast %cst_54 : f32 to vector<2x32xf32>
    %203 = vector.extract_strided_slice %200 {offsets = [0, 0], sizes = [2, 128], strides = [1, 1]} : vector<16x128xf32> to vector<2x128xf32>
    %204 = arith.truncf %201 : vector<2x32xf32> to vector<2x32xbf16>
    %cst_55 = arith.constant dense<0.000000e+00> : vector<2x128xf32>
    %205 = tpu.matmul %204, %195, %cst_55 {dimension_numbers = #tpu.dot_dimension_numbers<[1], [0], [0], [1], [0, 0, 1, 1], [], []>} : vector<2x32xbf16>, vector<32x128xbf16>, vector<2x128xf32> -> vector<2x128xf32>
    %206 = arith.addf %203, %205 : vector<2x128xf32>
    %207 = arith.mulf %206, %8 : vector<2x128xf32>
    %208 = math.tanh %207 : vector<2x128xf32>
    %cst_56 = arith.constant 5.000000e-01 : f32
    %209 = vector.broadcast %cst_56 : f32 to vector<2x128xf32>
    %210 = arith.mulf %209, %208 : vector<2x128xf32>
    %cst_57 = arith.constant 5.000000e-01 : f32
    %211 = vector.broadcast %cst_57 : f32 to vector<2x128xf32>
    %212 = arith.addf %210, %211 : vector<2x128xf32>
    %213 = arith.select %5, %208, %212 : vector<2x128xi1>, vector<2x128xf32>
    %214 = vector.extract_strided_slice %213 {offsets = [0, 0], sizes = [2, 32], strides = [1, 1]} : vector<2x128xf32> to vector<2x32xf32>
    %215 = vector.extract_strided_slice %213 {offsets = [0, 32], sizes = [2, 32], strides = [1, 1]} : vector<2x128xf32> to vector<2x32xf32>
    %216 = vector.extract_strided_slice %213 {offsets = [0, 64], sizes = [2, 32], strides = [1, 1]} : vector<2x128xf32> to vector<2x32xf32>
    %217 = vector.extract_strided_slice %213 {offsets = [0, 96], sizes = [2, 32], strides = [1, 1]} : vector<2x128xf32> to vector<2x32xf32>
    %218 = arith.mulf %215, %202 : vector<2x32xf32>
    %219 = arith.mulf %214, %216 : vector<2x32xf32>
    %220 = arith.addf %218, %219 : vector<2x32xf32>
    %221 = math.tanh %220 : vector<2x32xf32>
    %222 = arith.mulf %217, %221 : vector<2x32xf32>
    %223 = vector.extract_strided_slice %200 {offsets = [2, 0], sizes = [2, 128], strides = [1, 1]} : vector<16x128xf32> to vector<2x128xf32>
    %224 = arith.truncf %222 : vector<2x32xf32> to vector<2x32xbf16>
    %cst_58 = arith.constant dense<0.000000e+00> : vector<2x128xf32>
    %225 = tpu.matmul %224, %195, %cst_58 {dimension_numbers = #tpu.dot_dimension_numbers<[1], [0], [0], [1], [0, 0, 1, 1], [], []>} : vector<2x32xbf16>, vector<32x128xbf16>, vector<2x128xf32> -> vector<2x128xf32>
    %226 = arith.addf %223, %225 : vector<2x128xf32>
    %227 = arith.mulf %226, %8 : vector<2x128xf32>
    %228 = math.tanh %227 : vector<2x128xf32>
    %cst_59 = arith.constant 5.000000e-01 : f32
    %229 = vector.broadcast %cst_59 : f32 to vector<2x128xf32>
    %230 = arith.mulf %229, %228 : vector<2x128xf32>
    %cst_60 = arith.constant 5.000000e-01 : f32
    %231 = vector.broadcast %cst_60 : f32 to vector<2x128xf32>
    %232 = arith.addf %230, %231 : vector<2x128xf32>
    %233 = arith.select %5, %228, %232 : vector<2x128xi1>, vector<2x128xf32>
    %234 = vector.extract_strided_slice %233 {offsets = [0, 0], sizes = [2, 32], strides = [1, 1]} : vector<2x128xf32> to vector<2x32xf32>
    %235 = vector.extract_strided_slice %233 {offsets = [0, 32], sizes = [2, 32], strides = [1, 1]} : vector<2x128xf32> to vector<2x32xf32>
    %236 = vector.extract_strided_slice %233 {offsets = [0, 64], sizes = [2, 32], strides = [1, 1]} : vector<2x128xf32> to vector<2x32xf32>
    %237 = vector.extract_strided_slice %233 {offsets = [0, 96], sizes = [2, 32], strides = [1, 1]} : vector<2x128xf32> to vector<2x32xf32>
    %238 = arith.mulf %235, %220 : vector<2x32xf32>
    %239 = arith.mulf %234, %236 : vector<2x32xf32>
    %240 = arith.addf %238, %239 : vector<2x32xf32>
    %241 = math.tanh %240 : vector<2x32xf32>
    %242 = arith.mulf %237, %241 : vector<2x32xf32>
    %243 = vector.extract_strided_slice %200 {offsets = [4, 0], sizes = [2, 128], strides = [1, 1]} : vector<16x128xf32> to vector<2x128xf32>
    %244 = arith.truncf %242 : vector<2x32xf32> to vector<2x32xbf16>
    %cst_61 = arith.constant dense<0.000000e+00> : vector<2x128xf32>
    %245 = tpu.matmul %244, %195, %cst_61 {dimension_numbers = #tpu.dot_dimension_numbers<[1], [0], [0], [1], [0, 0, 1, 1], [], []>} : vector<2x32xbf16>, vector<32x128xbf16>, vector<2x128xf32> -> vector<2x128xf32>
    %246 = arith.addf %243, %245 : vector<2x128xf32>
    %247 = arith.mulf %246, %8 : vector<2x128xf32>
    %248 = math.tanh %247 : vector<2x128xf32>
    %cst_62 = arith.constant 5.000000e-01 : f32
    %249 = vector.broadcast %cst_62 : f32 to vector<2x128xf32>
    %250 = arith.mulf %249, %248 : vector<2x128xf32>
    %cst_63 = arith.constant 5.000000e-01 : f32
    %251 = vector.broadcast %cst_63 : f32 to vector<2x128xf32>
    %252 = arith.addf %250, %251 : vector<2x128xf32>
    %253 = arith.select %5, %248, %252 : vector<2x128xi1>, vector<2x128xf32>
    %254 = vector.extract_strided_slice %253 {offsets = [0, 0], sizes = [2, 32], strides = [1, 1]} : vector<2x128xf32> to vector<2x32xf32>
    %255 = vector.extract_strided_slice %253 {offsets = [0, 32], sizes = [2, 32], strides = [1, 1]} : vector<2x128xf32> to vector<2x32xf32>
    %256 = vector.extract_strided_slice %253 {offsets = [0, 64], sizes = [2, 32], strides = [1, 1]} : vector<2x128xf32> to vector<2x32xf32>
    %257 = vector.extract_strided_slice %253 {offsets = [0, 96], sizes = [2, 32], strides = [1, 1]} : vector<2x128xf32> to vector<2x32xf32>
    %258 = arith.mulf %255, %240 : vector<2x32xf32>
    %259 = arith.mulf %254, %256 : vector<2x32xf32>
    %260 = arith.addf %258, %259 : vector<2x32xf32>
    %261 = math.tanh %260 : vector<2x32xf32>
    %262 = arith.mulf %257, %261 : vector<2x32xf32>
    %263 = vector.extract_strided_slice %200 {offsets = [6, 0], sizes = [2, 128], strides = [1, 1]} : vector<16x128xf32> to vector<2x128xf32>
    %264 = arith.truncf %262 : vector<2x32xf32> to vector<2x32xbf16>
    %cst_64 = arith.constant dense<0.000000e+00> : vector<2x128xf32>
    %265 = tpu.matmul %264, %195, %cst_64 {dimension_numbers = #tpu.dot_dimension_numbers<[1], [0], [0], [1], [0, 0, 1, 1], [], []>} : vector<2x32xbf16>, vector<32x128xbf16>, vector<2x128xf32> -> vector<2x128xf32>
    %266 = arith.addf %263, %265 : vector<2x128xf32>
    %267 = arith.mulf %266, %8 : vector<2x128xf32>
    %268 = math.tanh %267 : vector<2x128xf32>
    %cst_65 = arith.constant 5.000000e-01 : f32
    %269 = vector.broadcast %cst_65 : f32 to vector<2x128xf32>
    %270 = arith.mulf %269, %268 : vector<2x128xf32>
    %cst_66 = arith.constant 5.000000e-01 : f32
    %271 = vector.broadcast %cst_66 : f32 to vector<2x128xf32>
    %272 = arith.addf %270, %271 : vector<2x128xf32>
    %273 = arith.select %5, %268, %272 : vector<2x128xi1>, vector<2x128xf32>
    %274 = vector.extract_strided_slice %273 {offsets = [0, 0], sizes = [2, 32], strides = [1, 1]} : vector<2x128xf32> to vector<2x32xf32>
    %275 = vector.extract_strided_slice %273 {offsets = [0, 32], sizes = [2, 32], strides = [1, 1]} : vector<2x128xf32> to vector<2x32xf32>
    %276 = vector.extract_strided_slice %273 {offsets = [0, 64], sizes = [2, 32], strides = [1, 1]} : vector<2x128xf32> to vector<2x32xf32>
    %277 = vector.extract_strided_slice %273 {offsets = [0, 96], sizes = [2, 32], strides = [1, 1]} : vector<2x128xf32> to vector<2x32xf32>
    %278 = arith.mulf %275, %260 : vector<2x32xf32>
    %279 = arith.mulf %274, %276 : vector<2x32xf32>
    %280 = arith.addf %278, %279 : vector<2x32xf32>
    %281 = math.tanh %280 : vector<2x32xf32>
    %282 = arith.mulf %277, %281 : vector<2x32xf32>
    %283 = vector.extract_strided_slice %200 {offsets = [8, 0], sizes = [2, 128], strides = [1, 1]} : vector<16x128xf32> to vector<2x128xf32>
    %284 = arith.truncf %282 : vector<2x32xf32> to vector<2x32xbf16>
    %cst_67 = arith.constant dense<0.000000e+00> : vector<2x128xf32>
    %285 = tpu.matmul %284, %195, %cst_67 {dimension_numbers = #tpu.dot_dimension_numbers<[1], [0], [0], [1], [0, 0, 1, 1], [], []>} : vector<2x32xbf16>, vector<32x128xbf16>, vector<2x128xf32> -> vector<2x128xf32>
    %286 = arith.addf %283, %285 : vector<2x128xf32>
    %287 = arith.mulf %286, %8 : vector<2x128xf32>
    %288 = math.tanh %287 : vector<2x128xf32>
    %cst_68 = arith.constant 5.000000e-01 : f32
    %289 = vector.broadcast %cst_68 : f32 to vector<2x128xf32>
    %290 = arith.mulf %289, %288 : vector<2x128xf32>
    %cst_69 = arith.constant 5.000000e-01 : f32
    %291 = vector.broadcast %cst_69 : f32 to vector<2x128xf32>
    %292 = arith.addf %290, %291 : vector<2x128xf32>
    %293 = arith.select %5, %288, %292 : vector<2x128xi1>, vector<2x128xf32>
    %294 = vector.extract_strided_slice %293 {offsets = [0, 0], sizes = [2, 32], strides = [1, 1]} : vector<2x128xf32> to vector<2x32xf32>
    %295 = vector.extract_strided_slice %293 {offsets = [0, 32], sizes = [2, 32], strides = [1, 1]} : vector<2x128xf32> to vector<2x32xf32>
    %296 = vector.extract_strided_slice %293 {offsets = [0, 64], sizes = [2, 32], strides = [1, 1]} : vector<2x128xf32> to vector<2x32xf32>
    %297 = vector.extract_strided_slice %293 {offsets = [0, 96], sizes = [2, 32], strides = [1, 1]} : vector<2x128xf32> to vector<2x32xf32>
    %298 = arith.mulf %295, %280 : vector<2x32xf32>
    %299 = arith.mulf %294, %296 : vector<2x32xf32>
    %300 = arith.addf %298, %299 : vector<2x32xf32>
    %301 = math.tanh %300 : vector<2x32xf32>
    %302 = arith.mulf %297, %301 : vector<2x32xf32>
    %303 = vector.extract_strided_slice %200 {offsets = [10, 0], sizes = [2, 128], strides = [1, 1]} : vector<16x128xf32> to vector<2x128xf32>
    %304 = arith.truncf %302 : vector<2x32xf32> to vector<2x32xbf16>
    %cst_70 = arith.constant dense<0.000000e+00> : vector<2x128xf32>
    %305 = tpu.matmul %304, %195, %cst_70 {dimension_numbers = #tpu.dot_dimension_numbers<[1], [0], [0], [1], [0, 0, 1, 1], [], []>} : vector<2x32xbf16>, vector<32x128xbf16>, vector<2x128xf32> -> vector<2x128xf32>
    %306 = arith.addf %303, %305 : vector<2x128xf32>
    %307 = arith.mulf %306, %8 : vector<2x128xf32>
    %308 = math.tanh %307 : vector<2x128xf32>
    %cst_71 = arith.constant 5.000000e-01 : f32
    %309 = vector.broadcast %cst_71 : f32 to vector<2x128xf32>
    %310 = arith.mulf %309, %308 : vector<2x128xf32>
    %cst_72 = arith.constant 5.000000e-01 : f32
    %311 = vector.broadcast %cst_72 : f32 to vector<2x128xf32>
    %312 = arith.addf %310, %311 : vector<2x128xf32>
    %313 = arith.select %5, %308, %312 : vector<2x128xi1>, vector<2x128xf32>
    %314 = vector.extract_strided_slice %313 {offsets = [0, 0], sizes = [2, 32], strides = [1, 1]} : vector<2x128xf32> to vector<2x32xf32>
    %315 = vector.extract_strided_slice %313 {offsets = [0, 32], sizes = [2, 32], strides = [1, 1]} : vector<2x128xf32> to vector<2x32xf32>
    %316 = vector.extract_strided_slice %313 {offsets = [0, 64], sizes = [2, 32], strides = [1, 1]} : vector<2x128xf32> to vector<2x32xf32>
    %317 = vector.extract_strided_slice %313 {offsets = [0, 96], sizes = [2, 32], strides = [1, 1]} : vector<2x128xf32> to vector<2x32xf32>
    %318 = arith.mulf %315, %300 : vector<2x32xf32>
    %319 = arith.mulf %314, %316 : vector<2x32xf32>
    %320 = arith.addf %318, %319 : vector<2x32xf32>
    %321 = math.tanh %320 : vector<2x32xf32>
    %322 = arith.mulf %317, %321 : vector<2x32xf32>
    %323 = vector.extract_strided_slice %200 {offsets = [12, 0], sizes = [2, 128], strides = [1, 1]} : vector<16x128xf32> to vector<2x128xf32>
    %324 = arith.truncf %322 : vector<2x32xf32> to vector<2x32xbf16>
    %cst_73 = arith.constant dense<0.000000e+00> : vector<2x128xf32>
    %325 = tpu.matmul %324, %195, %cst_73 {dimension_numbers = #tpu.dot_dimension_numbers<[1], [0], [0], [1], [0, 0, 1, 1], [], []>} : vector<2x32xbf16>, vector<32x128xbf16>, vector<2x128xf32> -> vector<2x128xf32>
    %326 = arith.addf %323, %325 : vector<2x128xf32>
    %327 = arith.mulf %326, %8 : vector<2x128xf32>
    %328 = math.tanh %327 : vector<2x128xf32>
    %cst_74 = arith.constant 5.000000e-01 : f32
    %329 = vector.broadcast %cst_74 : f32 to vector<2x128xf32>
    %330 = arith.mulf %329, %328 : vector<2x128xf32>
    %cst_75 = arith.constant 5.000000e-01 : f32
    %331 = vector.broadcast %cst_75 : f32 to vector<2x128xf32>
    %332 = arith.addf %330, %331 : vector<2x128xf32>
    %333 = arith.select %5, %328, %332 : vector<2x128xi1>, vector<2x128xf32>
    %334 = vector.extract_strided_slice %333 {offsets = [0, 0], sizes = [2, 32], strides = [1, 1]} : vector<2x128xf32> to vector<2x32xf32>
    %335 = vector.extract_strided_slice %333 {offsets = [0, 32], sizes = [2, 32], strides = [1, 1]} : vector<2x128xf32> to vector<2x32xf32>
    %336 = vector.extract_strided_slice %333 {offsets = [0, 64], sizes = [2, 32], strides = [1, 1]} : vector<2x128xf32> to vector<2x32xf32>
    %337 = vector.extract_strided_slice %333 {offsets = [0, 96], sizes = [2, 32], strides = [1, 1]} : vector<2x128xf32> to vector<2x32xf32>
    %338 = arith.mulf %335, %320 : vector<2x32xf32>
    %339 = arith.mulf %334, %336 : vector<2x32xf32>
    %340 = arith.addf %338, %339 : vector<2x32xf32>
    %341 = math.tanh %340 : vector<2x32xf32>
    %342 = arith.mulf %337, %341 : vector<2x32xf32>
    %343 = vector.extract_strided_slice %200 {offsets = [14, 0], sizes = [2, 128], strides = [1, 1]} : vector<16x128xf32> to vector<2x128xf32>
    %344 = arith.truncf %342 : vector<2x32xf32> to vector<2x32xbf16>
    %cst_76 = arith.constant dense<0.000000e+00> : vector<2x128xf32>
    %345 = tpu.matmul %344, %195, %cst_76 {dimension_numbers = #tpu.dot_dimension_numbers<[1], [0], [0], [1], [0, 0, 1, 1], [], []>} : vector<2x32xbf16>, vector<32x128xbf16>, vector<2x128xf32> -> vector<2x128xf32>
    %346 = arith.addf %343, %345 : vector<2x128xf32>
    %347 = arith.mulf %346, %8 : vector<2x128xf32>
    %348 = math.tanh %347 : vector<2x128xf32>
    %cst_77 = arith.constant 5.000000e-01 : f32
    %349 = vector.broadcast %cst_77 : f32 to vector<2x128xf32>
    %350 = arith.mulf %349, %348 : vector<2x128xf32>
    %cst_78 = arith.constant 5.000000e-01 : f32
    %351 = vector.broadcast %cst_78 : f32 to vector<2x128xf32>
    %352 = arith.addf %350, %351 : vector<2x128xf32>
    %353 = arith.select %5, %348, %352 : vector<2x128xi1>, vector<2x128xf32>
    %354 = vector.extract_strided_slice %353 {offsets = [0, 0], sizes = [2, 32], strides = [1, 1]} : vector<2x128xf32> to vector<2x32xf32>
    %355 = vector.extract_strided_slice %353 {offsets = [0, 32], sizes = [2, 32], strides = [1, 1]} : vector<2x128xf32> to vector<2x32xf32>
    %356 = vector.extract_strided_slice %353 {offsets = [0, 64], sizes = [2, 32], strides = [1, 1]} : vector<2x128xf32> to vector<2x32xf32>
    %357 = vector.extract_strided_slice %353 {offsets = [0, 96], sizes = [2, 32], strides = [1, 1]} : vector<2x128xf32> to vector<2x32xf32>
    %358 = arith.mulf %355, %340 : vector<2x32xf32>
    %359 = arith.mulf %354, %356 : vector<2x32xf32>
    %360 = arith.addf %358, %359 : vector<2x32xf32>
    %361 = math.tanh %360 : vector<2x32xf32>
    %362 = arith.mulf %357, %361 : vector<2x32xf32>
    %363 = arith.truncf %362 : vector<2x32xf32> to vector<2x32xbf16>
    %c0_79 = arith.constant 0 : index
    %c0_80 = arith.constant 0 : index
    %364 = vector.load %arg8[%c0_79, %c0_80] : memref<32x8xbf16, #tpu.memory_space<vmem>>, vector<32x8xbf16>
    %cst_81 = arith.constant dense<0.000000e+00> : vector<2x8xf32>
    %365 = tpu.matmul %363, %364, %cst_81 {dimension_numbers = #tpu.dot_dimension_numbers<[1], [0], [0], [1], [0, 0, 1, 1], [], []>} : vector<2x32xbf16>, vector<32x8xbf16>, vector<2x8xf32> -> vector<2x8xf32>
    %c0_82 = arith.constant 0 : index
    %c0_83 = arith.constant 0 : index
    %366 = vector.load %arg1[%c0_82, %c0_83] : memref<2x4xf32, #tpu.memory_space<vmem>>, vector<2x4xf32>
    %367 = arith.truncf %366 : vector<2x4xf32> to vector<2x4xbf16>
    %c0_84 = arith.constant 0 : index
    %c0_85 = arith.constant 0 : index
    %368 = vector.load %arg9[%c0_84, %c0_85] : memref<4x8xbf16, #tpu.memory_space<vmem>>, vector<4x8xbf16>
    %cst_86 = arith.constant dense<0.000000e+00> : vector<2x8xf32>
    %369 = tpu.matmul %367, %368, %cst_86 {dimension_numbers = #tpu.dot_dimension_numbers<[1], [0], [0], [1], [0, 0, 1, 1], [], []>} : vector<2x4xbf16>, vector<4x8xbf16>, vector<2x8xf32> -> vector<2x8xf32>
    %370 = arith.addf %365, %369 : vector<2x8xf32>
    %c0_87 = arith.constant 0 : index
    %c0_88 = arith.constant 0 : index
    %371 = vector.load %arg10[%c0_87, %c0_88] : memref<1x8xf32, #tpu.memory_space<vmem>>, vector<1x8xf32>
    %372 = vector.broadcast %371 : vector<1x8xf32> to vector<2x8xf32>
    %373 = arith.addf %370, %372 : vector<2x8xf32>
    %c0_89 = arith.constant 0 : index
    %c0_90 = arith.constant 0 : index
    %374 = vector.load %arg11[%c0_89, %c0_90] : memref<2x8xf32, #tpu.memory_space<vmem>>, vector<2x8xf32>
    tpu.vector_store %arg11[%c0_89, %c0_90], %373 {strides = array<i32>} : memref<2x8xf32, #tpu.memory_space<vmem>>, vector<2x8xf32>,
    return
  }
}

</mosaic_0001>

<llo_original>
// kernel: tpu_custom_call.1
$region0: #{tpu_custom_call.1}
  #allocation0 [shape = 'u32[]', space=smem, size = 0x4, offset = 0x4, fixed_abs, tag = 'smem constant byte address 0x4 - core index']
  #allocation1 [shape = 'u32[144,128]{1,0:T(1,128)}', space=vmem, size = 0x12000, scoped, tag = 'internal scratch']
  #allocation2 [shape = 'bf16[16,32]{1,0:T(16,128)(2,1)}', space=vmem, size = 0x1000, scoped, tag = 'scratch operand']
  %s0 = inlined_call_operand.hbm [shape: bf16[16,16], index: 0, kind: input, shape index: {}]
  %s1 = inlined_call_operand.vmem [shape: f32[2,4], index: 1, kind: input, shape index: {}]
  %s2 = inlined_call_operand.hbm [shape: bf16[16,128], index: 2, kind: input, shape index: {}]
  %s3 = inlined_call_operand.vmem [shape: bf16[32,128], index: 3, kind: input, shape index: {}]
  %s4 = inlined_call_operand.hbm [shape: f32[1,128], index: 4, kind: input, shape index: {}]
  %s5 = inlined_call_operand.vmem [shape: bf16[32,128], index: 5, kind: input, shape index: {}]
  %s6 = inlined_call_operand.hbm [shape: bf16[32,128], index: 6, kind: input, shape index: {}]
  %s7 = inlined_call_operand.vmem [shape: f32[1,128], index: 7, kind: input, shape index: {}]
  %s8 = inlined_call_operand.vmem [shape: bf16[32,8], index: 8, kind: input, shape index: {}]
  %s9 = inlined_call_operand.vmem [shape: bf16[4,8], index: 9, kind: input, shape index: {}]
  %s10 = inlined_call_operand.vmem [shape: f32[1,8], index: 10, kind: input, shape index: {}]
  %s11 = inlined_call_operand.hbm [shape: f32[2,8], index: 11, kind: output, shape index: {}]
  %s12 = sld [smem:[#allocation0]]
  $region70: #{tpu_custom_call.1} parent=0
    _
  %s14 = ssub.s32 1, %s12
  %s15 = scalar_select 0, %s14, %s12
  $region1: #{tpu_custom_call.1} parent=0
    #allocation3 [shape = 'u8[4096]{0}', space=vmem, size = 0x1000, scoped, tag = 'input window, operand 0, single buffered']
    #allocation4 [shape = 's32[1]{0}', space=sflag, size = 0x4, scoped, tag = 'scoped memory for tpu_custom_call.1']
    #allocation5 [shape = 's32[1]{0}', space=sflag, size = 0x4, scoped, tag = 'scoped memory for tpu_custom_call.1']
    #allocation6 [shape = 'u8[4096]{0}', space=vmem, size = 0x1000, scoped, tag = 'input window, operand 2, single buffered']
    #allocation7 [shape = 's32[1]{0}', space=sflag, size = 0x4, scoped, tag = 'scoped memory for tpu_custom_call.1']
    #allocation8 [shape = 'u8[512]{0}', space=vmem, size = 0x400, scoped, tag = 'input window, operand 4, single buffered']
    #allocation9 [shape = 'u8[8192]{0}', space=vmem, size = 0x2000, scoped, tag = 'input window, operand 6, single buffered']
    #allocation10 [shape = 's32[1]{0}', space=sflag, size = 0x4, scoped, tag = 'scoped memory for tpu_custom_call.1']
    #allocation11 [shape = 'u8[1024]{0}', space=vmem, size = 0x400, scoped, tag = 'output window, operand 0, single buffered']
    %16 = vsyncpa [#allocation4], 0
    %17 = vsyncpa [#allocation7], 0
    %18 = vsyncpa [#allocation10], 0
    %19 = vsyncpa [#allocation5], 0
    // Predicated region
    $region2: #{tpu_custom_call.1} parent=1 // pred_check
      _
    $region3: #{tpu_custom_call.1} parent=1 // pred_check_branch
      %21 = sbr.rel (0) target = $region5
    $region4: #{tpu_custom_call.1} parent=1 // pred_region
      %s23 = ssub.s32 128, 128
      %24 = vsyncadd [#allocation4], %s23
      %s25 = sshll.u32 [#allocation3], 4
      %s26 = int_to_ptr.vmem [resolvable:$true] %s25
      %31 = dma.hbm_to_vmem [thread:$0]  %s0, 128, %s26, [#allocation4], 64, 64, 4
    $region5: #{tpu_custom_call.1} parent=1 // pred_fallthru
      _
    // Predicated region
    $region6: #{tpu_custom_call.1} parent=1 // pred_check
      _
    $region7: #{tpu_custom_call.1} parent=1 // pred_check_branch
      %33 = sbr.rel (0) target = $region9
    $region8: #{tpu_custom_call.1} parent=1 // pred_region
      _
    $region9: #{tpu_custom_call.1} parent=1 // pred_fallthru
      _
    // Predicated region
    $region10: #{tpu_custom_call.1} parent=1 // pred_check
      _
    $region11: #{tpu_custom_call.1} parent=1 // pred_check_branch
      %35 = sbr.rel (0) target = $region13
    $region12: #{tpu_custom_call.1} parent=1 // pred_region
      %s37 = ssub.s32 128, 128
      %38 = vsyncadd [#allocation7], %s37
      %s39 = sshll.u32 [#allocation6], 4
      %s40 = int_to_ptr.vmem [resolvable:$true] %s39
      %45 = dma.hbm_to_vmem [thread:$0]  %s2, 128, %s40, [#allocation7], 64, 64, 4
    $region13: #{tpu_custom_call.1} parent=1 // pred_fallthru
      _
    // Predicated region
    $region14: #{tpu_custom_call.1} parent=1 // pred_check
      _
    $region15: #{tpu_custom_call.1} parent=1 // pred_check_branch
      %47 = sbr.rel (0) target = $region17
    $region16: #{tpu_custom_call.1} parent=1 // pred_region
      _
    $region17: #{tpu_custom_call.1} parent=1 // pred_fallthru
      _
    // Predicated region
    $region18: #{tpu_custom_call.1} parent=1 // pred_check
      _
    $region19: #{tpu_custom_call.1} parent=1 // pred_check_branch
      %49 = sbr.rel (0) target = $region21
    $region20: #{tpu_custom_call.1} parent=1 // pred_region
      %s51 = ssub.s32 16, 16
      %52 = vsyncadd [#allocation7], %s51
      %s54 = sshll.u32 [#allocation8], 4
      %s55 = int_to_ptr.vmem [resolvable:$true] %s54
      %57 = dma.hbm_to_vmem [thread:$0]  %s4, 16, %s55, [#allocation7]
    $region21: #{tpu_custom_call.1} parent=1 // pred_fallthru
      _
    // Predicated region
    $region22: #{tpu_custom_call.1} parent=1 // pred_check
      _
    $region23: #{tpu_custom_call.1} parent=1 // pred_check_branch
      %59 = sbr.rel (0) target = $region25
    $region24: #{tpu_custom_call.1} parent=1 // pred_region
      _
    $region25: #{tpu_custom_call.1} parent=1 // pred_fallthru
      _
    // Predicated region
    $region26: #{tpu_custom_call.1} parent=1 // pred_check
      _
    $region27: #{tpu_custom_call.1} parent=1 // pred_check_branch
      %61 = sbr.rel (0) target = $region29
    $region28: #{tpu_custom_call.1} parent=1 // pred_region
      %s63 = ssub.s32 256, 256
      %64 = vsyncadd [#allocation10], %s63
      %s65 = sshll.u32 [#allocation9], 4
      %s66 = int_to_ptr.vmem [resolvable:$true] %s65
      %71 = dma.hbm_to_vmem [thread:$0]  %s6, 256, %s66, [#allocation10], 64, 64, 4
    $region29: #{tpu_custom_call.1} parent=1 // pred_fallthru
      _
    // Predicated region
    $region30: #{tpu_custom_call.1} parent=1 // pred_check
      _
    $region31: #{tpu_custom_call.1} parent=1 // pred_check_branch
      %73 = sbr.rel (0) target = $region33
    $region32: #{tpu_custom_call.1} parent=1 // pred_region
      _
    $region33: #{tpu_custom_call.1} parent=1 // pred_fallthru
      _
    // Predicated region
    $region34: #{tpu_custom_call.1} parent=1 // pred_check
      _
    $region35: #{tpu_custom_call.1} parent=1 // pred_check_branch
      %75 = sbr.rel (0) target = $region37
    $region36: #{tpu_custom_call.1} parent=1 // pred_region
      _
    $region37: #{tpu_custom_call.1} parent=1 // pred_fallthru
      _
    // Predicated region
    $region38: #{tpu_custom_call.1} parent=1 // pred_check
      _
    $region39: #{tpu_custom_call.1} parent=1 // pred_check_branch
      %77 = sbr.rel (0) target = $region41
    $region40: #{tpu_custom_call.1} parent=1 // pred_region
      _
    $region41: #{tpu_custom_call.1} parent=1 // pred_fallthru
      _
    // Predicated region
    $region42: #{tpu_custom_call.1} parent=1 // pred_check
      _
    $region43: #{tpu_custom_call.1} parent=1 // pred_check_branch
      %79 = sbr.rel (0) target = $region45
    $region44: #{tpu_custom_call.1} parent=1 // pred_region
      _
    $region45: #{tpu_custom_call.1} parent=1 // pred_fallthru
      _
    // Predicated region
    $region46: #{tpu_custom_call.1} parent=1 // pred_check
      _
    $region47: #{tpu_custom_call.1} parent=1 // pred_check_branch
      %81 = sbr.rel (0) target = $region49
    $region48: #{tpu_custom_call.1} parent=1 // pred_region
      %82 = dma.done [#allocation4], 128
    $region49: #{tpu_custom_call.1} parent=1 // pred_fallthru
      _
    // Predicated region
    $region50: #{tpu_custom_call.1} parent=1 // pred_check
      _
    $region51: #{tpu_custom_call.1} parent=1 // pred_check_branch
      %84 = sbr.rel (0) target = $region53
    $region52: #{tpu_custom_call.1} parent=1 // pred_region
      %85 = dma.done [#allocation7], 128
    $region53: #{tpu_custom_call.1} parent=1 // pred_fallthru
      _
    // Predicated region
    $region54: #{tpu_custom_call.1} parent=1 // pred_check
      _
    $region55: #{tpu_custom_call.1} parent=1 // pred_check_branch
      %87 = sbr.rel (0) target = $region57
    $region56: #{tpu_custom_call.1} parent=1 // pred_region
      %88 = dma.done [#allocation7], 16
    $region57: #{tpu_custom_call.1} parent=1 // pred_fallthru
      _
    // Predicated region
    $region58: #{tpu_custom_call.1} parent=1 // pred_check
      _
    $region59: #{tpu_custom_call.1} parent=1 // pred_check_branch
      %90 = sbr.rel (0) target = $region61
    $region60: #{tpu_custom_call.1} parent=1 // pred_region
      %91 = dma.done [#allocation10], 256
    $region61: #{tpu_custom_call.1} parent=1 // pred_fallthru
      _
    %v93 = vlaneseq
    %v94 = vand.u32 %v93, 127
    %vm95 = vcmp.ge.s32.totalorder %v94, 64
    %vm96 = vcmp.lt.s32.totalorder %v94, 96
    %vm97 = vmand %vm95, %vm96
    %v98 = vsel %vm97, 1.0, 0.5
    %v99 = vld [vmem:[#allocation6] sm:$0xf]
    %v100 = vld [vmem:[#allocation6 + $0x4] sm:$0xf]
    %v101 = vld [vmem:[%s3] sm:$0xf]
    %v102 = vld [vmem:[%s3 + $0x4] sm:$0xf]
    %v103 = vld [vmem:[%s3 + $0x8] sm:$0xf]
    %v104 = vld [vmem:[%s3 + $0xc] sm:$0xf]
    %v105 = vld [vmem:[#allocation8] sm:$0x1]
    %v106 = vld [vmem:[#allocation3] sm:$0xf]
    %v107 = vld [vmem:[#allocation3 + $0x4] sm:$0xf]
    %v109 = vlaneseq
    %v110 = vshrl.u32 %v109, 7
    %v111 = vsub.s32 0, %v110
    %v112 = vrot.slane %v105, %v111
    %v116 = vunpack.c.l.b16 %v106
    %v117 = vunpack.c.l.b16 %v107
    %v118 = vpack.c.b16 %v117, %v116
    %v121 = vunpack.c.l.b16 %v99
    %v122 = vunpack.c.l.b16 %v100
    %v123 = vpack.c.b16 %v122, %v121
    %vm125 = vcmask 130048
    %v127 = vsel %vm125, %v118, 0
    %129 = vmatprep.subr.bf16.mxu0 0
    %130 = vmatpush1.bf16.msra.mxu0 %v123
    %131 = vmatprep.subr.bf16.mxu0 0
    %132 = vmatpush1.bf16.msra.mxu0 0
    %133 = vmatprep.subr.bf16.mxu0 0
    %134 = vmatpush1.bf16.msra.mxu0 0
    %135 = vmatprep.subr.bf16.mxu0 0
    %136 = vmatpush1.bf16.msra.mxu0 0
    %137 = vmatprep.subr.bf16.mxu0 0
    %138 = vmatpush1.bf16.msra.mxu0 0
    %139 = vmatprep.subr.bf16.mxu0 0
    %140 = vmatpush1.bf16.msra.mxu0 0
    %141 = vmatprep.subr.bf16.mxu0 0
    %142 = vmatpush1.bf16.msra.mxu0 0
    %143 = vmatprep.subr.bf16.mxu0 0
    %144 = vmatpush1.bf16.msra.mxu0 0
    %145 = vmatprep.subr.bf16.mxu0 0
    %146 = vmatpush1.bf16.msra.mxu0 0
    %147 = vmatprep.subr.bf16.mxu0 0
    %148 = vmatpush1.bf16.msra.mxu0 0
    %149 = vmatprep.subr.bf16.mxu0 0
    %150 = vmatpush1.bf16.msra.mxu0 0
    %151 = vmatprep.subr.bf16.mxu0 0
    %152 = vmatpush1.bf16.msra.mxu0 0
    %153 = vmatprep.subr.bf16.mxu0 0
    %154 = vmatpush1.bf16.msra.mxu0 0
    %155 = vmatprep.subr.bf16.mxu0 0
    %156 = vmatpush1.bf16.msra.mxu0 0
    %157 = vmatprep.subr.bf16.mxu0 0
    %158 = vmatpush1.bf16.msra.mxu0 0
    %159 = vmatprep.subr.bf16.mxu0 0
    %160 = vmatpush1.bf16.msra.mxu0 0
    %161 = vmatprep.mubr.bf16.mxu0 0
    %162 = vmatmul.mubr.bf16.gmra.mrb[0].mxu0 %v127
    %v163 = vpop.f32.mrb[0].mxu0
    %v164 = vadd.f32 %v112, %v163
    %v165 = vpop.f32.mrb[0].mxu0
    %v166 = vpop.f32.mrb[0].mxu0
    %v167 = vadd.f32 %v112, %v166
    %v168 = vpop.f32.mrb[0].mxu0
    %169 = vdwg.mxu0
    %v174 = vunpack.c.l.b16 %v101
    %v175 = vunpack.c.l.b16 %v102
    %v176 = vunpack.c.l.b16 %v103
    %v177 = vunpack.c.l.b16 %v104
    %v178 = vpack.c.b16 %v175, %v174
    %v179 = vpack.c.b16 %v177, %v176
    %vm182 = vcmask 261120
    %v184 = vsel %vm182, 0, 0
    %186 = vmatprep.subr.bf16.mxu0 0
    %187 = vmatpush1.bf16.msra.mxu0 %v178
    %188 = vmatprep.subr.bf16.mxu0 0
    %189 = vmatpush1.bf16.msra.mxu0 %v179
    %190 = vmatprep.subr.bf16.mxu0 0
    %191 = vmatpush1.bf16.msra.mxu0 0
    %192 = vmatprep.subr.bf16.mxu0 0
    %193 = vmatpush1.bf16.msra.mxu0 0
    %194 = vmatprep.subr.bf16.mxu0 0
    %195 = vmatpush1.bf16.msra.mxu0 0
    %196 = vmatprep.subr.bf16.mxu0 0
    %197 = vmatpush1.bf16.msra.mxu0 0
    %198 = vmatprep.subr.bf16.mxu0 0
    %199 = vmatpush1.bf16.msra.mxu0 0
    %200 = vmatprep.subr.bf16.mxu0 0
    %201 = vmatpush1.bf16.msra.mxu0 0
    %202 = vmatprep.subr.bf16.mxu0 0
    %203 = vmatpush1.bf16.msra.mxu0 0
    %204 = vmatprep.subr.bf16.mxu0 0
    %205 = vmatpush1.bf16.msra.mxu0 0
    %206 = vmatprep.subr.bf16.mxu0 0
    %207 = vmatpush1.bf16.msra.mxu0 0
    %208 = vmatprep.subr.bf16.mxu0 0
    %209 = vmatpush1.bf16.msra.mxu0 0
    %210 = vmatprep.subr.bf16.mxu0 0
    %211 = vmatpush1.bf16.msra.mxu0 0
    %212 = vmatprep.subr.bf16.mxu0 0
    %213 = vmatpush1.bf16.msra.mxu0 0
    %214 = vmatprep.subr.bf16.mxu0 0
    %215 = vmatpush1.bf16.msra.mxu0 0
    %216 = vmatprep.subr.bf16.mxu0 0
    %217 = vmatpush1.bf16.msra.mxu0 0
    %218 = vmatprep.mubr.bf16.mxu0 0
    %219 = vmatmul.mubr.bf16.gmra.mrb[0].mxu0 %v184
    %v220 = vpop.f32.mrb[0].mxu0
    %v221 = vadd.f32 0.0, %v220
    %v222 = vpop.f32.mrb[0].mxu0
    %v223 = vpop.f32.mrb[0].mxu0
    %v224 = vpop.f32.mrb[0].mxu0
    %225 = vdwg.mxu0
    %v226 = vadd.f32 %v164, %v221
    %v227 = vmul.f32 %v226, %v98
    %v228 = vtanh.pop %v227
    %v229 = vmul.f32 %v228, 0.5
    %v230 = vadd.f32 %v229, 0.5
    %v231 = vsel %vm97, %v228, %v230
    %v232 = vmul.f32 %v231, 0.0
    %234 = vrot.lane.b32.xlu0 %v231, 64
    %v235 = vpop.permute.xlu0 %234
    %v237 = vmul.f32 %v231, %v235
    %239 = vrot.lane.b32.xlu0 %v237, 32
    %v240 = vpop.permute.xlu0 %239
    %v242 = vadd.f32 %v232, %v240
    %v243 = vtanh.pop %v242
    %245 = vrot.lane.b32.xlu0 %v243, 64
    %v246 = vpop.permute.xlu0 %245
    %v248 = vmul.f32 %v231, %v246
    %v249 = vpack.c.bf16 %v248, %v248
    %251 = vrot.lane.b32.xlu0 %v249, 32
    %v252 = vpop.permute.xlu0 %251
    %vm254 = vcmask 253952
    %255 = vst.msk [vmem:[#allocation2] sm:$0x1] %vm254, %v252
    %v257 = vsel %vm182, %v252, 0
    %259 = vmatprep.subr.bf16.mxu0 0
    %260 = vmatpush1.bf16.msra.mxu0 %v178
    %261 = vmatprep.subr.bf16.mxu0 0
    %262 = vmatpush1.bf16.msra.mxu0 %v179
    %263 = vmatprep.subr.bf16.mxu0 0
    %264 = vmatpush1.bf16.msra.mxu0 0
    %265 = vmatprep.subr.bf16.mxu0 0
    %266 = vmatpush1.bf16.msra.mxu0 0
    %267 = vmatprep.subr.bf16.mxu0 0
    %268 = vmatpush1.bf16.msra.mxu0 0
    %269 = vmatprep.subr.bf16.mxu0 0
    %270 = vmatpush1.bf16.msra.mxu0 0
    %271 = vmatprep.subr.bf16.mxu0 0
    %272 = vmatpush1.bf16.msra.mxu0 0
    %273 = vmatprep.subr.bf16.mxu0 0
    %274 = vmatpush1.bf16.msra.mxu0 0
    %275 = vmatprep.subr.bf16.mxu0 0
    %276 = vmatpush1.bf16.msra.mxu0 0
    %277 = vmatprep.subr.bf16.mxu0 0
    %278 = vmatpush1.bf16.msra.mxu0 0
    %279 = vmatprep.subr.bf16.mxu0 0
    %280 = vmatpush1.bf16.msra.mxu0 0
    %281 = vmatprep.subr.bf16.mxu0 0
    %282 = vmatpush1.bf16.msra.mxu0 0
    %283 = vmatprep.subr.bf16.mxu0 0
    %284 = vmatpush1.bf16.msra.mxu0 0
    %285 = vmatprep.subr.bf16.mxu0 0
    %286 = vmatpush1.bf16.msra.mxu0 0
    %287 = vmatprep.subr.bf16.mxu0 0
    %288 = vmatpush1.bf16.msra.mxu0 0
    %289 = vmatprep.subr.bf16.mxu0 0
    %290 = vmatpush1.bf16.msra.mxu0 0
    %291 = vmatprep.mubr.bf16.mxu0 0
    %292 = vmatmul.mubr.bf16.gmra.mrb[0].mxu0 %v257
    %v293 = vpop.f32.mrb[0].mxu0
    %v294 = vadd.f32 0.0, %v293
    %v295 = vpop.f32.mrb[0].mxu0
    %v296 = vpop.f32.mrb[0].mxu0
    %v297 = vpop.f32.mrb[0].mxu0
    %298 = vdwg.mxu0
    %v300 = vrot.slane %v294, 6
    %v302 = vadd.f32 %v164, %v300
    %v303 = vmul.f32 %v302, %v98
    %v304 = vtanh.pop %v303
    %v305 = vmul.f32 %v304, 0.5
    %v306 = vadd.f32 %v305, 0.5
    %v307 = vsel %vm97, %v304, %v306
    %v309 = vrot.slane %v242, 6
    %v311 = vmul.f32 %v307, %v309
    %313 = vrot.lane.b32.xlu0 %v307, 64
    %v314 = vpop.permute.xlu0 %313
    %v316 = vmul.f32 %v307, %v314
    %318 = vrot.lane.b32.xlu0 %v316, 32
    %v319 = vpop.permute.xlu0 %318
    %v321 = vadd.f32 %v311, %v319
    %v322 = vtanh.pop %v321
    %324 = vrot.lane.b32.xlu0 %v322, 64
    %v325 = vpop.permute.xlu0 %324
    %v327 = vmul.f32 %v307, %v325
    %v328 = vpack.c.bf16 %v327, %v327
    %330 = vrot.lane.b32.xlu0 %v328, 32
    %v331 = vpop.permute.xlu0 %330
    %vm333 = vcmask 254977
    %334 = vst.msk [vmem:[#allocation2] sm:$0x2] %vm333, %v331
    %v335 = vrot.slane %v328, 1
    %336 = vrot.lane.b32.xlu0 %v335, 32
    %v337 = vpop.permute.xlu0 %336
    %v339 = vsel %vm182, %v337, 0
    %341 = vmatprep.subr.bf16.mxu0 0
    %342 = vmatpush1.bf16.msra.mxu0 %v178
    %343 = vmatprep.subr.bf16.mxu0 0
    %344 = vmatpush1.bf16.msra.mxu0 %v179
    %345 = vmatprep.subr.bf16.mxu0 0
    %346 = vmatpush1.bf16.msra.mxu0 0
    %347 = vmatprep.subr.bf16.mxu0 0
    %348 = vmatpush1.bf16.msra.mxu0 0
    %349 = vmatprep.subr.bf16.mxu0 0
    %350 = vmatpush1.bf16.msra.mxu0 0
    %351 = vmatprep.subr.bf16.mxu0 0
    %352 = vmatpush1.bf16.msra.mxu0 0
    %353 = vmatprep.subr.bf16.mxu0 0
    %354 = vmatpush1.bf16.msra.mxu0 0
    %355 = vmatprep.subr.bf16.mxu0 0
    %356 = vmatpush1.bf16.msra.mxu0 0
    %357 = vmatprep.subr.bf16.mxu0 0
    %358 = vmatpush1.bf16.msra.mxu0 0
    %359 = vmatprep.subr.bf16.mxu0 0
    %360 = vmatpush1.bf16.msra.mxu0 0
    %361 = vmatprep.subr.bf16.mxu0 0
    %362 = vmatpush1.bf16.msra.mxu0 0
    %363 = vmatprep.subr.bf16.mxu0 0
    %364 = vmatpush1.bf16.msra.mxu0 0
    %365 = vmatprep.subr.bf16.mxu0 0
    %366 = vmatpush1.bf16.msra.mxu0 0
    %367 = vmatprep.subr.bf16.mxu0 0
    %368 = vmatpush1.bf16.msra.mxu0 0
    %369 = vmatprep.subr.bf16.mxu0 0
    %370 = vmatpush1.bf16.msra.mxu0 0
    %371 = vmatprep.subr.bf16.mxu0 0
    %372 = vmatpush1.bf16.msra.mxu0 0
    %373 = vmatprep.mubr.bf16.mxu0 0
    %374 = vmatmul.mubr.bf16.gmra.mrb[0].mxu0 %v339
    %v375 = vpop.f32.mrb[0].mxu0
    %v376 = vadd.f32 0.0, %v375
    %v377 = vpop.f32.mrb[0].mxu0
    %v378 = vpop.f32.mrb[0].mxu0
    %v379 = vpop.f32.mrb[0].mxu0
    %380 = vdwg.mxu0
    %v382 = vrot.slane %v376, 4
    %v384 = vadd.f32 %v164, %v382
    %v385 = vmul.f32 %v384, %v98
    %v386 = vtanh.pop %v385
    %v387 = vmul.f32 %v386, 0.5
    %v388 = vadd.f32 %v387, 0.5
    %v389 = vsel %vm97, %v386, %v388
    %v391 = vrot.slane %v321, 6
    %v393 = vmul.f32 %v389, %v391
    %395 = vrot.lane.b32.xlu0 %v389, 64
    %v396 = vpop.permute.xlu0 %395
    %v398 = vmul.f32 %v389, %v396
    %400 = vrot.lane.b32.xlu0 %v398, 32
    %v401 = vpop.permute.xlu0 %400
    %v403 = vadd.f32 %v393, %v401
    %v404 = vtanh.pop %v403
    %406 = vrot.lane.b32.xlu0 %v404, 64
    %v407 = vpop.permute.xlu0 %406
    %v409 = vmul.f32 %v389, %v407
    %v410 = vpack.c.bf16 %v409, %v409
    %412 = vrot.lane.b32.xlu0 %v410, 32
    %v413 = vpop.permute.xlu0 %412
    %vm415 = vcmask 256002
    %416 = vst.msk [vmem:[#allocation2] sm:$0x4] %vm415, %v413
    %v417 = vrot.slane %v410, 2
    %418 = vrot.lane.b32.xlu0 %v417, 32
    %v419 = vpop.permute.xlu0 %418
    %v421 = vsel %vm182, %v419, 0
    %423 = vmatprep.subr.bf16.mxu0 0
    %424 = vmatpush1.bf16.msra.mxu0 %v178
    %425 = vmatprep.subr.bf16.mxu0 0
    %426 = vmatpush1.bf16.msra.mxu0 %v179
    %427 = vmatprep.subr.bf16.mxu0 0
    %428 = vmatpush1.bf16.msra.mxu0 0
    %429 = vmatprep.subr.bf16.mxu0 0
    %430 = vmatpush1.bf16.msra.mxu0 0
    %431 = vmatprep.subr.bf16.mxu0 0
    %432 = vmatpush1.bf16.msra.mxu0 0
    %433 = vmatprep.subr.bf16.mxu0 0
    %434 = vmatpush1.bf16.msra.mxu0 0
    %435 = vmatprep.subr.bf16.mxu0 0
    %436 = vmatpush1.bf16.msra.mxu0 0
    %437 = vmatprep.subr.bf16.mxu0 0
    %438 = vmatpush1.bf16.msra.mxu0 0
    %439 = vmatprep.subr.bf16.mxu0 0
    %440 = vmatpush1.bf16.msra.mxu0 0
    %441 = vmatprep.subr.bf16.mxu0 0
    %442 = vmatpush1.bf16.msra.mxu0 0
    %443 = vmatprep.subr.bf16.mxu0 0
    %444 = vmatpush1.bf16.msra.mxu0 0
    %445 = vmatprep.subr.bf16.mxu0 0
    %446 = vmatpush1.bf16.msra.mxu0 0
    %447 = vmatprep.subr.bf16.mxu0 0
    %448 = vmatpush1.bf16.msra.mxu0 0
    %449 = vmatprep.subr.bf16.mxu0 0
    %450 = vmatpush1.bf16.msra.mxu0 0
    %451 = vmatprep.subr.bf16.mxu0 0
    %452 = vmatpush1.bf16.msra.mxu0 0
    %453 = vmatprep.subr.bf16.mxu0 0
    %454 = vmatpush1.bf16.msra.mxu0 0
    %455 = vmatprep.mubr.bf16.mxu0 0
    %456 = vmatmul.mubr.bf16.gmra.mrb[0].mxu0 %v421
    %v457 = vpop.f32.mrb[0].mxu0
    %v458 = vadd.f32 0.0, %v457
    %v459 = vpop.f32.mrb[0].mxu0
    %v460 = vpop.f32.mrb[0].mxu0
    %v461 = vpop.f32.mrb[0].mxu0
    %462 = vdwg.mxu0
    %v464 = vrot.slane %v458, 2
    %v466 = vadd.f32 %v164, %v464
    %v467 = vmul.f32 %v466, %v98
    %v468 = vtanh.pop %v467
    %v469 = vmul.f32 %v468, 0.5
    %v470 = vadd.f32 %v469, 0.5
    %v471 = vsel %vm97, %v468, %v470
    %v473 = vrot.slane %v403, 6
    %v475 = vmul.f32 %v471, %v473
    %477 = vrot.lane.b32.xlu0 %v471, 64
    %v478 = vpop.permute.xlu0 %477
    %v480 = vmul.f32 %v471, %v478
    %482 = vrot.lane.b32.xlu0 %v480, 32
    %v483 = vpop.permute.xlu0 %482
    %v485 = vadd.f32 %v475, %v483
    %v486 = vtanh.pop %v485
    %488 = vrot.lane.b32.xlu0 %v486, 64
    %v489 = vpop.permute.xlu0 %488
    %v491 = vmul.f32 %v471, %v489
    %v492 = vpack.c.bf16 %v491, %v491
    %494 = vrot.lane.b32.xlu0 %v492, 32
    %v495 = vpop.permute.xlu0 %494
    %vm497 = vcmask 257027
    %498 = vst.msk [vmem:[#allocation2] sm:$0x8] %vm497, %v495
    %v499 = vrot.slane %v492, 3
    %500 = vrot.lane.b32.xlu0 %v499, 32
    %v501 = vpop.permute.xlu0 %500
    %v503 = vsel %vm182, %v501, 0
    %505 = vmatprep.subr.bf16.mxu0 0
    %506 = vmatpush1.bf16.msra.mxu0 %v178
    %507 = vmatprep.subr.bf16.mxu0 0
    %508 = vmatpush1.bf16.msra.mxu0 %v179
    %509 = vmatprep.subr.bf16.mxu0 0
    %510 = vmatpush1.bf16.msra.mxu0 0
    %511 = vmatprep.subr.bf16.mxu0 0
    %512 = vmatpush1.bf16.msra.mxu0 0
    %513 = vmatprep.subr.bf16.mxu0 0
    %514 = vmatpush1.bf16.msra.mxu0 0
    %515 = vmatprep.subr.bf16.mxu0 0
    %516 = vmatpush1.bf16.msra.mxu0 0
    %517 = vmatprep.subr.bf16.mxu0 0
    %518 = vmatpush1.bf16.msra.mxu0 0
    %519 = vmatprep.subr.bf16.mxu0 0
    %520 = vmatpush1.bf16.msra.mxu0 0
    %521 = vmatprep.subr.bf16.mxu0 0
    %522 = vmatpush1.bf16.msra.mxu0 0
    %523 = vmatprep.subr.bf16.mxu0 0
    %524 = vmatpush1.bf16.msra.mxu0 0
    %525 = vmatprep.subr.bf16.mxu0 0
    %526 = vmatpush1.bf16.msra.mxu0 0
    %527 = vmatprep.subr.bf16.mxu0 0
    %528 = vmatpush1.bf16.msra.mxu0 0
    %529 = vmatprep.subr.bf16.mxu0 0
    %530 = vmatpush1.bf16.msra.mxu0 0
    %531 = vmatprep.subr.bf16.mxu0 0
    %532 = vmatpush1.bf16.msra.mxu0 0
    %533 = vmatprep.subr.bf16.mxu0 0
    %534 = vmatpush1.bf16.msra.mxu0 0
    %535 = vmatprep.subr.bf16.mxu0 0
    %536 = vmatpush1.bf16.msra.mxu0 0
    %537 = vmatprep.mubr.bf16.mxu0 0
    %538 = vmatmul.mubr.bf16.gmra.mrb[0].mxu0 %v503
    %v539 = vpop.f32.mrb[0].mxu0
    %v540 = vadd.f32 0.0, %v539
    %v541 = vpop.f32.mrb[0].mxu0
    %v542 = vpop.f32.mrb[0].mxu0
    %v543 = vpop.f32.mrb[0].mxu0
    %544 = vdwg.mxu0
    %v545 = vadd.f32 %v167, %v540
    %v546 = vmul.f32 %v545, %v98
    %v547 = vtanh.pop %v546
    %v548 = vmul.f32 %v547, 0.5
    %v549 = vadd.f32 %v548, 0.5
    %v550 = vsel %vm97, %v547, %v549
    %v552 = vrot.slane %v485, 6
    %v554 = vmul.f32 %v550, %v552
    %556 = vrot.lane.b32.xlu0 %v550, 64
    %v557 = vpop.permute.xlu0 %556
    %v559 = vmul.f32 %v550, %v557
    %561 = vrot.lane.b32.xlu0 %v559, 32
    %v562 = vpop.permute.xlu0 %561
    %v564 = vadd.f32 %v554, %v562
    %v565 = vtanh.pop %v564
    %567 = vrot.lane.b32.xlu0 %v565, 64
    %v568 = vpop.permute.xlu0 %567
    %v570 = vmul.f32 %v550, %v568
    %v571 = vpack.c.bf16 %v570, %v570
    %v573 = vrot.slane %v571, 4
    %574 = vrot.lane.b32.xlu0 %v573, 32
    %v575 = vpop.permute.xlu0 %574
    %vm577 = vcmask 258052
    %578 = vst.msk [vmem:[#allocation2] sm:$0x10] %vm577, %v575
    %579 = vrot.lane.b32.xlu0 %v571, 32
    %v580 = vpop.permute.xlu0 %579
    %v582 = vsel %vm182, %v580, 0
    %584 = vmatprep.subr.bf16.mxu0 0
    %585 = vmatpush1.bf16.msra.mxu0 %v178
    %586 = vmatprep.subr.bf16.mxu0 0
    %587 = vmatpush1.bf16.msra.mxu0 %v179
    %588 = vmatprep.subr.bf16.mxu0 0
    %589 = vmatpush1.bf16.msra.mxu0 0
    %590 = vmatprep.subr.bf16.mxu0 0
    %591 = vmatpush1.bf16.msra.mxu0 0
    %592 = vmatprep.subr.bf16.mxu0 0
    %593 = vmatpush1.bf16.msra.mxu0 0
    %594 = vmatprep.subr.bf16.mxu0 0
    %595 = vmatpush1.bf16.msra.mxu0 0
    %596 = vmatprep.subr.bf16.mxu0 0
    %597 = vmatpush1.bf16.msra.mxu0 0
    %598 = vmatprep.subr.bf16.mxu0 0
    %599 = vmatpush1.bf16.msra.mxu0 0
    %600 = vmatprep.subr.bf16.mxu0 0
    %601 = vmatpush1.bf16.msra.mxu0 0
    %602 = vmatprep.subr.bf16.mxu0 0
    %603 = vmatpush1.bf16.msra.mxu0 0
    %604 = vmatprep.subr.bf16.mxu0 0
    %605 = vmatpush1.bf16.msra.mxu0 0
    %606 = vmatprep.subr.bf16.mxu0 0
    %607 = vmatpush1.bf16.msra.mxu0 0
    %608 = vmatprep.subr.bf16.mxu0 0
    %609 = vmatpush1.bf16.msra.mxu0 0
    %610 = vmatprep.subr.bf16.mxu0 0
    %611 = vmatpush1.bf16.msra.mxu0 0
    %612 = vmatprep.subr.bf16.mxu0 0
    %613 = vmatpush1.bf16.msra.mxu0 0
    %614 = vmatprep.subr.bf16.mxu0 0
    %615 = vmatpush1.bf16.msra.mxu0 0
    %616 = vmatprep.mubr.bf16.mxu0 0
    %617 = vmatmul.mubr.bf16.gmra.mrb[0].mxu0 %v582
    %v618 = vpop.f32.mrb[0].mxu0
    %v619 = vadd.f32 0.0, %v618
    %v620 = vpop.f32.mrb[0].mxu0
    %v621 = vpop.f32.mrb[0].mxu0
    %v622 = vpop.f32.mrb[0].mxu0
    %623 = vdwg.mxu0
    %v625 = vrot.slane %v619, 6
    %v627 = vadd.f32 %v167, %v625
    %v628 = vmul.f32 %v627, %v98
    %v629 = vtanh.pop %v628
    %v630 = vmul.f32 %v629, 0.5
    %v631 = vadd.f32 %v630, 0.5
    %v632 = vsel %vm97, %v629, %v631
    %v634 = vrot.slane %v564, 6
    %v636 = vmul.f32 %v632, %v634
    %638 = vrot.lane.b32.xlu0 %v632, 64
    %v639 = vpop.permute.xlu0 %638
    %v641 = vmul.f32 %v632, %v639
    %643 = vrot.lane.b32.xlu0 %v641, 32
    %v644 = vpop.permute.xlu0 %643
    %v646 = vadd.f32 %v636, %v644
    %v647 = vtanh.pop %v646
    %649 = vrot.lane.b32.xlu0 %v647, 64
    %v650 = vpop.permute.xlu0 %649
    %v652 = vmul.f32 %v632, %v650
    %v653 = vpack.c.bf16 %v652, %v652
    %v655 = vrot.slane %v653, 4
    %656 = vrot.lane.b32.xlu0 %v655, 32
    %v657 = vpop.permute.xlu0 %656
    %vm659 = vcmask 259077
    %660 = vst.msk [vmem:[#allocation2] sm:$0x20] %vm659, %v657
    %v661 = vrot.slane %v653, 1
    %662 = vrot.lane.b32.xlu0 %v661, 32
    %v663 = vpop.permute.xlu0 %662
    %v665 = vsel %vm182, %v663, 0
    %667 = vmatprep.subr.bf16.mxu0 0
    %668 = vmatpush1.bf16.msra.mxu0 %v178
    %669 = vmatprep.subr.bf16.mxu0 0
    %670 = vmatpush1.bf16.msra.mxu0 %v179
    %671 = vmatprep.subr.bf16.mxu0 0
    %672 = vmatpush1.bf16.msra.mxu0 0
    %673 = vmatprep.subr.bf16.mxu0 0
    %674 = vmatpush1.bf16.msra.mxu0 0
    %675 = vmatprep.subr.bf16.mxu0 0
    %676 = vmatpush1.bf16.msra.mxu0 0
    %677 = vmatprep.subr.bf16.mxu0 0
    %678 = vmatpush1.bf16.msra.mxu0 0
    %679 = vmatprep.subr.bf16.mxu0 0
    %680 = vmatpush1.bf16.msra.mxu0 0
    %681 = vmatprep.subr.bf16.mxu0 0
    %682 = vmatpush1.bf16.msra.mxu0 0
    %683 = vmatprep.subr.bf16.mxu0 0
    %684 = vmatpush1.bf16.msra.mxu0 0
    %685 = vmatprep.subr.bf16.mxu0 0
    %686 = vmatpush1.bf16.msra.mxu0 0
    %687 = vmatprep.subr.bf16.mxu0 0
    %688 = vmatpush1.bf16.msra.mxu0 0
    %689 = vmatprep.subr.bf16.mxu0 0
    %690 = vmatpush1.bf16.msra.mxu0 0
    %691 = vmatprep.subr.bf16.mxu0 0
    %692 = vmatpush1.bf16.msra.mxu0 0
    %693 = vmatprep.subr.bf16.mxu0 0
    %694 = vmatpush1.bf16.msra.mxu0 0
    %695 = vmatprep.subr.bf16.mxu0 0
    %696 = vmatpush1.bf16.msra.mxu0 0
    %697 = vmatprep.subr.bf16.mxu0 0
    %698 = vmatpush1.bf16.msra.mxu0 0
    %699 = vmatprep.mubr.bf16.mxu0 0
    %700 = vmatmul.mubr.bf16.gmra.mrb[0].mxu0 %v665
    %v701 = vpop.f32.mrb[0].mxu0
    %v702 = vadd.f32 0.0, %v701
    %v703 = vpop.f32.mrb[0].mxu0
    %v704 = vpop.f32.mrb[0].mxu0
    %v705 = vpop.f32.mrb[0].mxu0
    %706 = vdwg.mxu0
    %v708 = vrot.slane %v702, 4
    %v710 = vadd.f32 %v167, %v708
    %v711 = vmul.f32 %v710, %v98
    %v712 = vtanh.pop %v711
    %v713 = vmul.f32 %v712, 0.5
    %v714 = vadd.f32 %v713, 0.5
    %v715 = vsel %vm97, %v712, %v714
    %v717 = vrot.slane %v646, 6
    %v719 = vmul.f32 %v715, %v717
    %721 = vrot.lane.b32.xlu0 %v715, 64
    %v722 = vpop.permute.xlu0 %721
    %v724 = vmul.f32 %v715, %v722
    %726 = vrot.lane.b32.xlu0 %v724, 32
    %v727 = vpop.permute.xlu0 %726
    %v729 = vadd.f32 %v719, %v727
    %v730 = vtanh.pop %v729
    %732 = vrot.lane.b32.xlu0 %v730, 64
    %v733 = vpop.permute.xlu0 %732
    %v735 = vmul.f32 %v715, %v733
    %v736 = vpack.c.bf16 %v735, %v735
    %v738 = vrot.slane %v736, 4
    %739 = vrot.lane.b32.xlu0 %v738, 32
    %v740 = vpop.permute.xlu0 %739
    %vm742 = vcmask 260102
    %743 = vst.msk [vmem:[#allocation2] sm:$0x40] %vm742, %v740
    %v744 = vrot.slane %v736, 2
    %745 = vrot.lane.b32.xlu0 %v744, 32
    %v746 = vpop.permute.xlu0 %745
    %v748 = vsel %vm182, %v746, 0
    %750 = vmatprep.subr.bf16.mxu0 0
    %751 = vmatpush1.bf16.msra.mxu0 %v178
    %752 = vmatprep.subr.bf16.mxu0 0
    %753 = vmatpush1.bf16.msra.mxu0 %v179
    %754 = vmatprep.subr.bf16.mxu0 0
    %755 = vmatpush1.bf16.msra.mxu0 0
    %756 = vmatprep.subr.bf16.mxu0 0
    %757 = vmatpush1.bf16.msra.mxu0 0
    %758 = vmatprep.subr.bf16.mxu0 0
    %759 = vmatpush1.bf16.msra.mxu0 0
    %760 = vmatprep.subr.bf16.mxu0 0
    %761 = vmatpush1.bf16.msra.mxu0 0
    %762 = vmatprep.subr.bf16.mxu0 0
    %763 = vmatpush1.bf16.msra.mxu0 0
    %764 = vmatprep.subr.bf16.mxu0 0
    %765 = vmatpush1.bf16.msra.mxu0 0
    %766 = vmatprep.subr.bf16.mxu0 0
    %767 = vmatpush1.bf16.msra.mxu0 0
    %768 = vmatprep.subr.bf16.mxu0 0
    %769 = vmatpush1.bf16.msra.mxu0 0
    %770 = vmatprep.subr.bf16.mxu0 0
    %771 = vmatpush1.bf16.msra.mxu0 0
    %772 = vmatprep.subr.bf16.mxu0 0
    %773 = vmatpush1.bf16.msra.mxu0 0
    %774 = vmatprep.subr.bf16.mxu0 0
    %775 = vmatpush1.bf16.msra.mxu0 0
    %776 = vmatprep.subr.bf16.mxu0 0
    %777 = vmatpush1.bf16.msra.mxu0 0
    %778 = vmatprep.subr.bf16.mxu0 0
    %779 = vmatpush1.bf16.msra.mxu0 0
    %780 = vmatprep.subr.bf16.mxu0 0
    %781 = vmatpush1.bf16.msra.mxu0 0
    %782 = vmatprep.mubr.bf16.mxu0 0
    %783 = vmatmul.mubr.bf16.gmra.mrb[0].mxu0 %v748
    %v784 = vpop.f32.mrb[0].mxu0
    %v785 = vadd.f32 0.0, %v784
    %v786 = vpop.f32.mrb[0].mxu0
    %v787 = vpop.f32.mrb[0].mxu0
    %v788 = vpop.f32.mrb[0].mxu0
    %789 = vdwg.mxu0
    %v791 = vrot.slane %v785, 2
    %v793 = vadd.f32 %v167, %v791
    %v794 = vmul.f32 %v793, %v98
    %v795 = vtanh.pop %v794
    %v796 = vmul.f32 %v795, 0.5
    %v797 = vadd.f32 %v796, 0.5
    %v798 = vsel %vm97, %v795, %v797
    %v800 = vrot.slane %v729, 6
    %v802 = vmul.f32 %v798, %v800
    %804 = vrot.lane.b32.xlu0 %v798, 64
    %v805 = vpop.permute.xlu0 %804
    %v807 = vmul.f32 %v798, %v805
    %809 = vrot.lane.b32.xlu0 %v807, 32
    %v810 = vpop.permute.xlu0 %809
    %v812 = vadd.f32 %v802, %v810
    %v813 = vtanh.pop %v812
    %815 = vrot.lane.b32.xlu0 %v813, 64
    %v816 = vpop.permute.xlu0 %815
    %v818 = vmul.f32 %v798, %v816
    %v819 = vpack.c.bf16 %v818, %v818
    %v821 = vrot.slane %v819, 4
    %822 = vrot.lane.b32.xlu0 %v821, 32
    %v823 = vpop.permute.xlu0 %822
    %vm825 = vcmask 261127
    %826 = vst.msk [vmem:[#allocation2] sm:$0x80] %vm825, %v823
    %v827 = vld [vmem:[%s5] sm:$0xf]
    %v828 = vld [vmem:[%s5 + $0x4] sm:$0xf]
    %v829 = vld [vmem:[%s5 + $0x8] sm:$0xf]
    %v830 = vld [vmem:[%s5 + $0xc] sm:$0xf]
    %v831 = vld [vmem:[#allocation9] sm:$0xf]
    %v832 = vld [vmem:[#allocation9 + $0x4] sm:$0xf]
    %v833 = vld [vmem:[#allocation9 + $0x8] sm:$0xf]
    %v834 = vld [vmem:[#allocation9 + $0xc] sm:$0xf]
    %v835 = vld [vmem:[%s7] sm:$0x1]
    %v836 = vld [vmem:[#allocation2] sm:$0xff]
    %v838 = vlaneseq
    %v839 = vshrl.u32 %v838, 7
    %v840 = vsub.s32 0, %v839
    %v841 = vrot.slane %v835, %v840
    %v847 = vunpack.c.l.b16 %v827
    %v848 = vunpack.c.l.b16 %v828
    %v849 = vunpack.c.l.b16 %v829
    %v850 = vunpack.c.l.b16 %v830
    %v851 = vpack.c.b16 %v848, %v847
    %v852 = vpack.c.b16 %v850, %v849
    %v856 = vsel %vm182, %v836, 0
    %858 = vmatprep.subr.bf16.mxu0 0
    %859 = vmatpush1.bf16.msra.mxu0 %v851
    %860 = vmatprep.subr.bf16.mxu0 0
    %861 = vmatpush1.bf16.msra.mxu0 %v852
    %862 = vmatprep.subr.bf16.mxu0 0
    %863 = vmatpush1.bf16.msra.mxu0 0
    %864 = vmatprep.subr.bf16.mxu0 0
    %865 = vmatpush1.bf16.msra.mxu0 0
    %866 = vmatprep.subr.bf16.mxu0 0
    %867 = vmatpush1.bf16.msra.mxu0 0
    %868 = vmatprep.subr.bf16.mxu0 0
    %869 = vmatpush1.bf16.msra.mxu0 0
    %870 = vmatprep.subr.bf16.mxu0 0
    %871 = vmatpush1.bf16.msra.mxu0 0
    %872 = vmatprep.subr.bf16.mxu0 0
    %873 = vmatpush1.bf16.msra.mxu0 0
    %874 = vmatprep.subr.bf16.mxu0 0
    %875 = vmatpush1.bf16.msra.mxu0 0
    %876 = vmatprep.subr.bf16.mxu0 0
    %877 = vmatpush1.bf16.msra.mxu0 0
    %878 = vmatprep.subr.bf16.mxu0 0
    %879 = vmatpush1.bf16.msra.mxu0 0
    %880 = vmatprep.subr.bf16.mxu0 0
    %881 = vmatpush1.bf16.msra.mxu0 0
    %882 = vmatprep.subr.bf16.mxu0 0
    %883 = vmatpush1.bf16.msra.mxu0 0
    %884 = vmatprep.subr.bf16.mxu0 0
    %885 = vmatpush1.bf16.msra.mxu0 0
    %886 = vmatprep.subr.bf16.mxu0 0
    %887 = vmatpush1.bf16.msra.mxu0 0
    %888 = vmatprep.subr.bf16.mxu0 0
    %889 = vmatpush1.bf16.msra.mxu0 0
    %890 = vmatprep.mubr.bf16.mxu0 0
    %891 = vmatmul.mubr.bf16.gmra.mrb[0].mxu0 %v856
    %v892 = vpop.f32.mrb[0].mxu0
    %v893 = vadd.f32 %v841, %v892
    %v894 = vpop.f32.mrb[0].mxu0
    %v895 = vpop.f32.mrb[0].mxu0
    %v896 = vadd.f32 %v841, %v895
    %v897 = vpop.f32.mrb[0].mxu0
    %898 = vdwg.mxu0
    %v903 = vunpack.c.l.b16 %v831
    %v904 = vunpack.c.l.b16 %v832
    %v905 = vunpack.c.l.b16 %v833
    %v906 = vunpack.c.l.b16 %v834
    %v907 = vpack.c.b16 %v904, %v903
    %v908 = vpack.c.b16 %v906, %v905
    %911 = vmatprep.subr.bf16.mxu0 0
    %912 = vmatpush1.bf16.msra.mxu0 %v907
    %913 = vmatprep.subr.bf16.mxu0 0
    %914 = vmatpush1.bf16.msra.mxu0 %v908
    %915 = vmatprep.subr.bf16.mxu0 0
    %916 = vmatpush1.bf16.msra.mxu0 0
    %917 = vmatprep.subr.bf16.mxu0 0
    %918 = vmatpush1.bf16.msra.mxu0 0
    %919 = vmatprep.subr.bf16.mxu0 0
    %920 = vmatpush1.bf16.msra.mxu0 0
    %921 = vmatprep.subr.bf16.mxu0 0
    %922 = vmatpush1.bf16.msra.mxu0 0
    %923 = vmatprep.subr.bf16.mxu0 0
    %924 = vmatpush1.bf16.msra.mxu0 0
    %925 = vmatprep.subr.bf16.mxu0 0
    %926 = vmatpush1.bf16.msra.mxu0 0
    %927 = vmatprep.subr.bf16.mxu0 0
    %928 = vmatpush1.bf16.msra.mxu0 0
    %929 = vmatprep.subr.bf16.mxu0 0
    %930 = vmatpush1.bf16.msra.mxu0 0
    %931 = vmatprep.subr.bf16.mxu0 0
    %932 = vmatpush1.bf16.msra.mxu0 0
    %933 = vmatprep.subr.bf16.mxu0 0
    %934 = vmatpush1.bf16.msra.mxu0 0
    %935 = vmatprep.subr.bf16.mxu0 0
    %936 = vmatpush1.bf16.msra.mxu0 0
    %937 = vmatprep.subr.bf16.mxu0 0
    %938 = vmatpush1.bf16.msra.mxu0 0
    %939 = vmatprep.subr.bf16.mxu0 0
    %940 = vmatpush1.bf16.msra.mxu0 0
    %941 = vmatprep.subr.bf16.mxu0 0
    %942 = vmatpush1.bf16.msra.mxu0 0
    %943 = vmatprep.mubr.bf16.mxu0 0
    %944 = vmatmul.mubr.bf16.gmra.mrb[0].mxu0 %v184
    %v945 = vpop.f32.mrb[0].mxu0
    %v946 = vadd.f32 0.0, %v945
    %v947 = vpop.f32.mrb[0].mxu0
    %v948 = vpop.f32.mrb[0].mxu0
    %v949 = vpop.f32.mrb[0].mxu0
    %950 = vdwg.mxu0
    %v951 = vadd.f32 %v893, %v946
    %v952 = vmul.f32 %v951, %v98
    %v953 = vtanh.pop %v952
    %v954 = vmul.f32 %v953, 0.5
    %v955 = vadd.f32 %v954, 0.5
    %v956 = vsel %vm97, %v953, %v955
    %v957 = vmul.f32 %v956, 0.0
    %959 = vrot.lane.b32.xlu0 %v956, 64
    %v960 = vpop.permute.xlu0 %959
    %v962 = vmul.f32 %v956, %v960
    %964 = vrot.lane.b32.xlu0 %v962, 32
    %v965 = vpop.permute.xlu0 %964
    %v967 = vadd.f32 %v957, %v965
    %v968 = vtanh.pop %v967
    %970 = vrot.lane.b32.xlu0 %v968, 64
    %v971 = vpop.permute.xlu0 %970
    %v973 = vmul.f32 %v956, %v971
    %v974 = vpack.c.bf16 %v973, %v973
    %976 = vrot.lane.b32.xlu0 %v974, 32
    %v977 = vpop.permute.xlu0 %976
    %v979 = vsel %vm182, %v977, 0
    %981 = vmatprep.subr.bf16.mxu0 0
    %982 = vmatpush1.bf16.msra.mxu0 %v907
    %983 = vmatprep.subr.bf16.mxu0 0
    %984 = vmatpush1.bf16.msra.mxu0 %v908
    %985 = vmatprep.subr.bf16.mxu0 0
    %986 = vmatpush1.bf16.msra.mxu0 0
    %987 = vmatprep.subr.bf16.mxu0 0
    %988 = vmatpush1.bf16.msra.mxu0 0
    %989 = vmatprep.subr.bf16.mxu0 0
    %990 = vmatpush1.bf16.msra.mxu0 0
    %991 = vmatprep.subr.bf16.mxu0 0
    %992 = vmatpush1.bf16.msra.mxu0 0
    %993 = vmatprep.subr.bf16.mxu0 0
    %994 = vmatpush1.bf16.msra.mxu0 0
    %995 = vmatprep.subr.bf16.mxu0 0
    %996 = vmatpush1.bf16.msra.mxu0 0
    %997 = vmatprep.subr.bf16.mxu0 0
    %998 = vmatpush1.bf16.msra.mxu0 0
    %999 = vmatprep.subr.bf16.mxu0 0
    %1000 = vmatpush1.bf16.msra.mxu0 0
    %1001 = vmatprep.subr.bf16.mxu0 0
    %1002 = vmatpush1.bf16.msra.mxu0 0
    %1003 = vmatprep.subr.bf16.mxu0 0
    %1004 = vmatpush1.bf16.msra.mxu0 0
    %1005 = vmatprep.subr.bf16.mxu0 0
    %1006 = vmatpush1.bf16.msra.mxu0 0
    %1007 = vmatprep.subr.bf16.mxu0 0
    %1008 = vmatpush1.bf16.msra.mxu0 0
    %1009 = vmatprep.subr.bf16.mxu0 0
    %1010 = vmatpush1.bf16.msra.mxu0 0
    %1011 = vmatprep.subr.bf16.mxu0 0
    %1012 = vmatpush1.bf16.msra.mxu0 0
    %1013 = vmatprep.mubr.bf16.mxu0 0
    %1014 = vmatmul.mubr.bf16.gmra.mrb[0].mxu0 %v979
    %v1015 = vpop.f32.mrb[0].mxu0
    %v1016 = vadd.f32 0.0, %v1015
    %v1017 = vpop.f32.mrb[0].mxu0
    %v1018 = vpop.f32.mrb[0].mxu0
    %v1019 = vpop.f32.mrb[0].mxu0
    %1020 = vdwg.mxu0
    %v1022 = vrot.slane %v1016, 6
    %v1024 = vadd.f32 %v893, %v1022
    %v1025 = vmul.f32 %v1024, %v98
    %v1026 = vtanh.pop %v1025
    %v1027 = vmul.f32 %v1026, 0.5
    %v1028 = vadd.f32 %v1027, 0.5
    %v1029 = vsel %vm97, %v1026, %v1028
    %v1031 = vrot.slane %v967, 6
    %v1033 = vmul.f32 %v1029, %v1031
    %1035 = vrot.lane.b32.xlu0 %v1029, 64
    %v1036 = vpop.permute.xlu0 %1035
    %v1038 = vmul.f32 %v1029, %v1036
    %1040 = vrot.lane.b32.xlu0 %v1038, 32
    %v1041 = vpop.permute.xlu0 %1040
    %v1043 = vadd.f32 %v1033, %v1041
    %v1044 = vtanh.pop %v1043
    %1046 = vrot.lane.b32.xlu0 %v1044, 64
    %v1047 = vpop.permute.xlu0 %1046
    %v1049 = vmul.f32 %v1029, %v1047
    %v1050 = vpack.c.bf16 %v1049, %v1049
    %v1052 = vrot.slane %v1050, 1
    %1053 = vrot.lane.b32.xlu0 %v1052, 32
    %v1054 = vpop.permute.xlu0 %1053
    %v1056 = vsel %vm182, %v1054, 0
    %1058 = vmatprep.subr.bf16.mxu0 0
    %1059 = vmatpush1.bf16.msra.mxu0 %v907
    %1060 = vmatprep.subr.bf16.mxu0 0
    %1061 = vmatpush1.bf16.msra.mxu0 %v908
    %1062 = vmatprep.subr.bf16.mxu0 0
    %1063 = vmatpush1.bf16.msra.mxu0 0
    %1064 = vmatprep.subr.bf16.mxu0 0
    %1065 = vmatpush1.bf16.msra.mxu0 0
    %1066 = vmatprep.subr.bf16.mxu0 0
    %1067 = vmatpush1.bf16.msra.mxu0 0
    %1068 = vmatprep.subr.bf16.mxu0 0
    %1069 = vmatpush1.bf16.msra.mxu0 0
    %1070 = vmatprep.subr.bf16.mxu0 0
    %1071 = vmatpush1.bf16.msra.mxu0 0
    %1072 = vmatprep.subr.bf16.mxu0 0
    %1073 = vmatpush1.bf16.msra.mxu0 0
    %1074 = vmatprep.subr.bf16.mxu0 0
    %1075 = vmatpush1.bf16.msra.mxu0 0
    %1076 = vmatprep.subr.bf16.mxu0 0
    %1077 = vmatpush1.bf16.msra.mxu0 0
    %1078 = vmatprep.subr.bf16.mxu0 0
    %1079 = vmatpush1.bf16.msra.mxu0 0
    %1080 = vmatprep.subr.bf16.mxu0 0
    %1081 = vmatpush1.bf16.msra.mxu0 0
    %1082 = vmatprep.subr.bf16.mxu0 0
    %1083 = vmatpush1.bf16.msra.mxu0 0
    %1084 = vmatprep.subr.bf16.mxu0 0
    %1085 = vmatpush1.bf16.msra.mxu0 0
    %1086 = vmatprep.subr.bf16.mxu0 0
    %1087 = vmatpush1.bf16.msra.mxu0 0
    %1088 = vmatprep.subr.bf16.mxu0 0
    %1089 = vmatpush1.bf16.msra.mxu0 0
    %1090 = vmatprep.mubr.bf16.mxu0 0
    %1091 = vmatmul.mubr.bf16.gmra.mrb[0].mxu0 %v1056
    %v1092 = vpop.f32.mrb[0].mxu0
    %v1093 = vadd.f32 0.0, %v1092
    %v1094 = vpop.f32.mrb[0].mxu0
    %v1095 = vpop.f32.mrb[0].mxu0
    %v1096 = vpop.f32.mrb[0].mxu0
    %1097 = vdwg.mxu0
    %v1099 = vrot.slane %v1093, 4
    %v1101 = vadd.f32 %v893, %v1099
    %v1102 = vmul.f32 %v1101, %v98
    %v1103 = vtanh.pop %v1102
    %v1104 = vmul.f32 %v1103, 0.5
    %v1105 = vadd.f32 %v1104, 0.5
    %v1106 = vsel %vm97, %v1103, %v1105
    %v1108 = vrot.slane %v1043, 6
    %v1110 = vmul.f32 %v1106, %v1108
    %1112 = vrot.lane.b32.xlu0 %v1106, 64
    %v1113 = vpop.permute.xlu0 %1112
    %v1115 = vmul.f32 %v1106, %v1113
    %1117 = vrot.lane.b32.xlu0 %v1115, 32
    %v1118 = vpop.permute.xlu0 %1117
    %v1120 = vadd.f32 %v1110, %v1118
    %v1121 = vtanh.pop %v1120
    %1123 = vrot.lane.b32.xlu0 %v1121, 64
    %v1124 = vpop.permute.xlu0 %1123
    %v1126 = vmul.f32 %v1106, %v1124
    %v1127 = vpack.c.bf16 %v1126, %v1126
    %v1129 = vrot.slane %v1127, 2
    %1130 = vrot.lane.b32.xlu0 %v1129, 32
    %v1131 = vpop.permute.xlu0 %1130
    %v1133 = vsel %vm182, %v1131, 0
    %1135 = vmatprep.subr.bf16.mxu0 0
    %1136 = vmatpush1.bf16.msra.mxu0 %v907
    %1137 = vmatprep.subr.bf16.mxu0 0
    %1138 = vmatpush1.bf16.msra.mxu0 %v908
    %1139 = vmatprep.subr.bf16.mxu0 0
    %1140 = vmatpush1.bf16.msra.mxu0 0
    %1141 = vmatprep.subr.bf16.mxu0 0
    %1142 = vmatpush1.bf16.msra.mxu0 0
    %1143 = vmatprep.subr.bf16.mxu0 0
    %1144 = vmatpush1.bf16.msra.mxu0 0
    %1145 = vmatprep.subr.bf16.mxu0 0
    %1146 = vmatpush1.bf16.msra.mxu0 0
    %1147 = vmatprep.subr.bf16.mxu0 0
    %1148 = vmatpush1.bf16.msra.mxu0 0
    %1149 = vmatprep.subr.bf16.mxu0 0
    %1150 = vmatpush1.bf16.msra.mxu0 0
    %1151 = vmatprep.subr.bf16.mxu0 0
    %1152 = vmatpush1.bf16.msra.mxu0 0
    %1153 = vmatprep.subr.bf16.mxu0 0
    %1154 = vmatpush1.bf16.msra.mxu0 0
    %1155 = vmatprep.subr.bf16.mxu0 0
    %1156 = vmatpush1.bf16.msra.mxu0 0
    %1157 = vmatprep.subr.bf16.mxu0 0
    %1158 = vmatpush1.bf16.msra.mxu0 0
    %1159 = vmatprep.subr.bf16.mxu0 0
    %1160 = vmatpush1.bf16.msra.mxu0 0
    %1161 = vmatprep.subr.bf16.mxu0 0
    %1162 = vmatpush1.bf16.msra.mxu0 0
    %1163 = vmatprep.subr.bf16.mxu0 0
    %1164 = vmatpush1.bf16.msra.mxu0 0
    %1165 = vmatprep.subr.bf16.mxu0 0
    %1166 = vmatpush1.bf16.msra.mxu0 0
    %1167 = vmatprep.mubr.bf16.mxu0 0
    %1168 = vmatmul.mubr.bf16.gmra.mrb[0].mxu0 %v1133
    %v1169 = vpop.f32.mrb[0].mxu0
    %v1170 = vadd.f32 0.0, %v1169
    %v1171 = vpop.f32.mrb[0].mxu0
    %v1172 = vpop.f32.mrb[0].mxu0
    %v1173 = vpop.f32.mrb[0].mxu0
    %1174 = vdwg.mxu0
    %v1176 = vrot.slane %v1170, 2
    %v1178 = vadd.f32 %v893, %v1176
    %v1179 = vmul.f32 %v1178, %v98
    %v1180 = vtanh.pop %v1179
    %v1181 = vmul.f32 %v1180, 0.5
    %v1182 = vadd.f32 %v1181, 0.5
    %v1183 = vsel %vm97, %v1180, %v1182
    %v1185 = vrot.slane %v1120, 6
    %v1187 = vmul.f32 %v1183, %v1185
    %1189 = vrot.lane.b32.xlu0 %v1183, 64
    %v1190 = vpop.permute.xlu0 %1189
    %v1192 = vmul.f32 %v1183, %v1190
    %1194 = vrot.lane.b32.xlu0 %v1192, 32
    %v1195 = vpop.permute.xlu0 %1194
    %v1197 = vadd.f32 %v1187, %v1195
    %v1198 = vtanh.pop %v1197
    %1200 = vrot.lane.b32.xlu0 %v1198, 64
    %v1201 = vpop.permute.xlu0 %1200
    %v1203 = vmul.f32 %v1183, %v1201
    %v1204 = vpack.c.bf16 %v1203, %v1203
    %v1206 = vrot.slane %v1204, 3
    %1207 = vrot.lane.b32.xlu0 %v1206, 32
    %v1208 = vpop.permute.xlu0 %1207
    %v1210 = vsel %vm182, %v1208, 0
    %1212 = vmatprep.subr.bf16.mxu0 0
    %1213 = vmatpush1.bf16.msra.mxu0 %v907
    %1214 = vmatprep.subr.bf16.mxu0 0
    %1215 = vmatpush1.bf16.msra.mxu0 %v908
    %1216 = vmatprep.subr.bf16.mxu0 0
    %1217 = vmatpush1.bf16.msra.mxu0 0
    %1218 = vmatprep.subr.bf16.mxu0 0
    %1219 = vmatpush1.bf16.msra.mxu0 0
    %1220 = vmatprep.subr.bf16.mxu0 0
    %1221 = vmatpush1.bf16.msra.mxu0 0
    %1222 = vmatprep.subr.bf16.mxu0 0
    %1223 = vmatpush1.bf16.msra.mxu0 0
    %1224 = vmatprep.subr.bf16.mxu0 0
    %1225 = vmatpush1.bf16.msra.mxu0 0
    %1226 = vmatprep.subr.bf16.mxu0 0
    %1227 = vmatpush1.bf16.msra.mxu0 0
    %1228 = vmatprep.subr.bf16.mxu0 0
    %1229 = vmatpush1.bf16.msra.mxu0 0
    %1230 = vmatprep.subr.bf16.mxu0 0
    %1231 = vmatpush1.bf16.msra.mxu0 0
    %1232 = vmatprep.subr.bf16.mxu0 0
    %1233 = vmatpush1.bf16.msra.mxu0 0
    %1234 = vmatprep.subr.bf16.mxu0 0
    %1235 = vmatpush1.bf16.msra.mxu0 0
    %1236 = vmatprep.subr.bf16.mxu0 0
    %1237 = vmatpush1.bf16.msra.mxu0 0
    %1238 = vmatprep.subr.bf16.mxu0 0
    %1239 = vmatpush1.bf16.msra.mxu0 0
    %1240 = vmatprep.subr.bf16.mxu0 0
    %1241 = vmatpush1.bf16.msra.mxu0 0
    %1242 = vmatprep.subr.bf16.mxu0 0
    %1243 = vmatpush1.bf16.msra.mxu0 0
    %1244 = vmatprep.mubr.bf16.mxu0 0
    %1245 = vmatmul.mubr.bf16.gmra.mrb[0].mxu0 %v1210
    %v1246 = vpop.f32.mrb[0].mxu0
    %v1247 = vadd.f32 0.0, %v1246
    %v1248 = vpop.f32.mrb[0].mxu0
    %v1249 = vpop.f32.mrb[0].mxu0
    %v1250 = vpop.f32.mrb[0].mxu0
    %1251 = vdwg.mxu0
    %v1252 = vadd.f32 %v896, %v1247
    %v1253 = vmul.f32 %v1252, %v98
    %v1254 = vtanh.pop %v1253
    %v1255 = vmul.f32 %v1254, 0.5
    %v1256 = vadd.f32 %v1255, 0.5
    %v1257 = vsel %vm97, %v1254, %v1256
    %v1259 = vrot.slane %v1197, 6
    %v1261 = vmul.f32 %v1257, %v1259
    %1263 = vrot.lane.b32.xlu0 %v1257, 64
    %v1264 = vpop.permute.xlu0 %1263
    %v1266 = vmul.f32 %v1257, %v1264
    %1268 = vrot.lane.b32.xlu0 %v1266, 32
    %v1269 = vpop.permute.xlu0 %1268
    %v1271 = vadd.f32 %v1261, %v1269
    %v1272 = vtanh.pop %v1271
    %1274 = vrot.lane.b32.xlu0 %v1272, 64
    %v1275 = vpop.permute.xlu0 %1274
    %v1277 = vmul.f32 %v1257, %v1275
    %v1278 = vpack.c.bf16 %v1277, %v1277
    %1280 = vrot.lane.b32.xlu0 %v1278, 32
    %v1281 = vpop.permute.xlu0 %1280
    %v1283 = vsel %vm182, %v1281, 0
    %1285 = vmatprep.subr.bf16.mxu0 0
    %1286 = vmatpush1.bf16.msra.mxu0 %v907
    %1287 = vmatprep.subr.bf16.mxu0 0
    %1288 = vmatpush1.bf16.msra.mxu0 %v908
    %1289 = vmatprep.subr.bf16.mxu0 0
    %1290 = vmatpush1.bf16.msra.mxu0 0
    %1291 = vmatprep.subr.bf16.mxu0 0
    %1292 = vmatpush1.bf16.msra.mxu0 0
    %1293 = vmatprep.subr.bf16.mxu0 0
    %1294 = vmatpush1.bf16.msra.mxu0 0
    %1295 = vmatprep.subr.bf16.mxu0 0
    %1296 = vmatpush1.bf16.msra.mxu0 0
    %1297 = vmatprep.subr.bf16.mxu0 0
    %1298 = vmatpush1.bf16.msra.mxu0 0
    %1299 = vmatprep.subr.bf16.mxu0 0
    %1300 = vmatpush1.bf16.msra.mxu0 0
    %1301 = vmatprep.subr.bf16.mxu0 0
    %1302 = vmatpush1.bf16.msra.mxu0 0
    %1303 = vmatprep.subr.bf16.mxu0 0
    %1304 = vmatpush1.bf16.msra.mxu0 0
    %1305 = vmatprep.subr.bf16.mxu0 0
    %1306 = vmatpush1.bf16.msra.mxu0 0
    %1307 = vmatprep.subr.bf16.mxu0 0
    %1308 = vmatpush1.bf16.msra.mxu0 0
    %1309 = vmatprep.subr.bf16.mxu0 0
    %1310 = vmatpush1.bf16.msra.mxu0 0
    %1311 = vmatprep.subr.bf16.mxu0 0
    %1312 = vmatpush1.bf16.msra.mxu0 0
    %1313 = vmatprep.subr.bf16.mxu0 0
    %1314 = vmatpush1.bf16.msra.mxu0 0
    %1315 = vmatprep.subr.bf16.mxu0 0
    %1316 = vmatpush1.bf16.msra.mxu0 0
    %1317 = vmatprep.mubr.bf16.mxu0 0
    %1318 = vmatmul.mubr.bf16.gmra.mrb[0].mxu0 %v1283
    %v1319 = vpop.f32.mrb[0].mxu0
    %v1320 = vadd.f32 0.0, %v1319
    %v1321 = vpop.f32.mrb[0].mxu0
    %v1322 = vpop.f32.mrb[0].mxu0
    %v1323 = vpop.f32.mrb[0].mxu0
    %1324 = vdwg.mxu0
    %v1326 = vrot.slane %v1320, 6
    %v1328 = vadd.f32 %v896, %v1326
    %v1329 = vmul.f32 %v1328, %v98
    %v1330 = vtanh.pop %v1329
    %v1331 = vmul.f32 %v1330, 0.5
    %v1332 = vadd.f32 %v1331, 0.5
    %v1333 = vsel %vm97, %v1330, %v1332
    %v1335 = vrot.slane %v1271, 6
    %v1337 = vmul.f32 %v1333, %v1335
    %1339 = vrot.lane.b32.xlu0 %v1333, 64
    %v1340 = vpop.permute.xlu0 %1339
    %v1342 = vmul.f32 %v1333, %v1340
    %1344 = vrot.lane.b32.xlu0 %v1342, 32
    %v1345 = vpop.permute.xlu0 %1344
    %v1347 = vadd.f32 %v1337, %v1345
    %v1348 = vtanh.pop %v1347
    %1350 = vrot.lane.b32.xlu0 %v1348, 64
    %v1351 = vpop.permute.xlu0 %1350
    %v1353 = vmul.f32 %v1333, %v1351
    %v1354 = vpack.c.bf16 %v1353, %v1353
    %v1356 = vrot.slane %v1354, 1
    %1357 = vrot.lane.b32.xlu0 %v1356, 32
    %v1358 = vpop.permute.xlu0 %1357
    %v1360 = vsel %vm182, %v1358, 0
    %1362 = vmatprep.subr.bf16.mxu0 0
    %1363 = vmatpush1.bf16.msra.mxu0 %v907
    %1364 = vmatprep.subr.bf16.mxu0 0
    %1365 = vmatpush1.bf16.msra.mxu0 %v908
    %1366 = vmatprep.subr.bf16.mxu0 0
    %1367 = vmatpush1.bf16.msra.mxu0 0
    %1368 = vmatprep.subr.bf16.mxu0 0
    %1369 = vmatpush1.bf16.msra.mxu0 0
    %1370 = vmatprep.subr.bf16.mxu0 0
    %1371 = vmatpush1.bf16.msra.mxu0 0
    %1372 = vmatprep.subr.bf16.mxu0 0
    %1373 = vmatpush1.bf16.msra.mxu0 0
    %1374 = vmatprep.subr.bf16.mxu0 0
    %1375 = vmatpush1.bf16.msra.mxu0 0
    %1376 = vmatprep.subr.bf16.mxu0 0
    %1377 = vmatpush1.bf16.msra.mxu0 0
    %1378 = vmatprep.subr.bf16.mxu0 0
    %1379 = vmatpush1.bf16.msra.mxu0 0
    %1380 = vmatprep.subr.bf16.mxu0 0
    %1381 = vmatpush1.bf16.msra.mxu0 0
    %1382 = vmatprep.subr.bf16.mxu0 0
    %1383 = vmatpush1.bf16.msra.mxu0 0
    %1384 = vmatprep.subr.bf16.mxu0 0
    %1385 = vmatpush1.bf16.msra.mxu0 0
    %1386 = vmatprep.subr.bf16.mxu0 0
    %1387 = vmatpush1.bf16.msra.mxu0 0
    %1388 = vmatprep.subr.bf16.mxu0 0
    %1389 = vmatpush1.bf16.msra.mxu0 0
    %1390 = vmatprep.subr.bf16.mxu0 0
    %1391 = vmatpush1.bf16.msra.mxu0 0
    %1392 = vmatprep.subr.bf16.mxu0 0
    %1393 = vmatpush1.bf16.msra.mxu0 0
    %1394 = vmatprep.mubr.bf16.mxu0 0
    %1395 = vmatmul.mubr.bf16.gmra.mrb[0].mxu0 %v1360
    %v1396 = vpop.f32.mrb[0].mxu0
    %v1397 = vadd.f32 0.0, %v1396
    %v1398 = vpop.f32.mrb[0].mxu0
    %v1399 = vpop.f32.mrb[0].mxu0
    %v1400 = vpop.f32.mrb[0].mxu0
    %1401 = vdwg.mxu0
    %v1403 = vrot.slane %v1397, 4
    %v1405 = vadd.f32 %v896, %v1403
    %v1406 = vmul.f32 %v1405, %v98
    %v1407 = vtanh.pop %v1406
    %v1408 = vmul.f32 %v1407, 0.5
    %v1409 = vadd.f32 %v1408, 0.5
    %v1410 = vsel %vm97, %v1407, %v1409
    %v1412 = vrot.slane %v1347, 6
    %v1414 = vmul.f32 %v1410, %v1412
    %1416 = vrot.lane.b32.xlu0 %v1410, 64
    %v1417 = vpop.permute.xlu0 %1416
    %v1419 = vmul.f32 %v1410, %v1417
    %1421 = vrot.lane.b32.xlu0 %v1419, 32
    %v1422 = vpop.permute.xlu0 %1421
    %v1424 = vadd.f32 %v1414, %v1422
    %v1425 = vtanh.pop %v1424
    %1427 = vrot.lane.b32.xlu0 %v1425, 64
    %v1428 = vpop.permute.xlu0 %1427
    %v1430 = vmul.f32 %v1410, %v1428
    %v1431 = vpack.c.bf16 %v1430, %v1430
    %v1433 = vrot.slane %v1431, 2
    %1434 = vrot.lane.b32.xlu0 %v1433, 32
    %v1435 = vpop.permute.xlu0 %1434
    %v1437 = vsel %vm182, %v1435, 0
    %1439 = vmatprep.subr.bf16.mxu0 0
    %1440 = vmatpush1.bf16.msra.mxu0 %v907
    %1441 = vmatprep.subr.bf16.mxu0 0
    %1442 = vmatpush1.bf16.msra.mxu0 %v908
    %1443 = vmatprep.subr.bf16.mxu0 0
    %1444 = vmatpush1.bf16.msra.mxu0 0
    %1445 = vmatprep.subr.bf16.mxu0 0
    %1446 = vmatpush1.bf16.msra.mxu0 0
    %1447 = vmatprep.subr.bf16.mxu0 0
    %1448 = vmatpush1.bf16.msra.mxu0 0
    %1449 = vmatprep.subr.bf16.mxu0 0
    %1450 = vmatpush1.bf16.msra.mxu0 0
    %1451 = vmatprep.subr.bf16.mxu0 0
    %1452 = vmatpush1.bf16.msra.mxu0 0
    %1453 = vmatprep.subr.bf16.mxu0 0
    %1454 = vmatpush1.bf16.msra.mxu0 0
    %1455 = vmatprep.subr.bf16.mxu0 0
    %1456 = vmatpush1.bf16.msra.mxu0 0
    %1457 = vmatprep.subr.bf16.mxu0 0
    %1458 = vmatpush1.bf16.msra.mxu0 0
    %1459 = vmatprep.subr.bf16.mxu0 0
    %1460 = vmatpush1.bf16.msra.mxu0 0
    %1461 = vmatprep.subr.bf16.mxu0 0
    %1462 = vmatpush1.bf16.msra.mxu0 0
    %1463 = vmatprep.subr.bf16.mxu0 0
    %1464 = vmatpush1.bf16.msra.mxu0 0
    %1465 = vmatprep.subr.bf16.mxu0 0
    %1466 = vmatpush1.bf16.msra.mxu0 0
    %1467 = vmatprep.subr.bf16.mxu0 0
    %1468 = vmatpush1.bf16.msra.mxu0 0
    %1469 = vmatprep.subr.bf16.mxu0 0
    %1470 = vmatpush1.bf16.msra.mxu0 0
    %1471 = vmatprep.mubr.bf16.mxu0 0
    %1472 = vmatmul.mubr.bf16.gmra.mrb[0].mxu0 %v1437
    %v1473 = vpop.f32.mrb[0].mxu0
    %v1474 = vadd.f32 0.0, %v1473
    %v1475 = vpop.f32.mrb[0].mxu0
    %v1476 = vpop.f32.mrb[0].mxu0
    %v1477 = vpop.f32.mrb[0].mxu0
    %1478 = vdwg.mxu0
    %v1480 = vrot.slane %v1474, 2
    %v1482 = vadd.f32 %v896, %v1480
    %v1483 = vmul.f32 %v1482, %v98
    %v1484 = vtanh.pop %v1483
    %v1485 = vmul.f32 %v1484, 0.5
    %v1486 = vadd.f32 %v1485, 0.5
    %v1487 = vsel %vm97, %v1484, %v1486
    %v1489 = vrot.slane %v1424, 6
    %v1491 = vmul.f32 %v1487, %v1489
    %1493 = vrot.lane.b32.xlu0 %v1487, 64
    %v1494 = vpop.permute.xlu0 %1493
    %v1496 = vmul.f32 %v1487, %v1494
    %1498 = vrot.lane.b32.xlu0 %v1496, 32
    %v1499 = vpop.permute.xlu0 %1498
    %v1501 = vadd.f32 %v1491, %v1499
    %v1502 = vtanh.pop %v1501
    %1504 = vrot.lane.b32.xlu0 %v1502, 64
    %v1505 = vpop.permute.xlu0 %1504
    %v1507 = vmul.f32 %v1487, %v1505
    %v1508 = vpack.c.bf16 %v1507, %v1507
    %v1509 = vld [vmem:[%s8] sm:$0xf]
    %v1510 = vld [vmem:[%s8 + $0x4] sm:$0xf]
    %v1511 = vld [vmem:[%s8 + $0x8] sm:$0xf]
    %v1512 = vld [vmem:[%s8 + $0xc] sm:$0xf]
    %v1513 = vld [vmem:[%s1] sm:$0x3]
    %v1514 = vpack.c.bf16 %v1513, %v1513
    %v1515 = vld [vmem:[%s9] sm:$0x3]
    %vm1516 = vcmask 31744
    %v1518 = vsel %vm1516, %v1514, 0
    %vm1520 = vcmask 1041408
    %v1522 = vsel %vm1520, %v1515, 0
    %1524 = vmatprep.subr.bf16.mxu0 0
    %1525 = vmatpush1.bf16.msra.mxu0 %v1522
    %1526 = vmatprep.subr.bf16.mxu0 0
    %1527 = vmatpush1.bf16.msra.mxu0 0
    %1528 = vmatprep.subr.bf16.mxu0 0
    %1529 = vmatpush1.bf16.msra.mxu0 0
    %1530 = vmatprep.subr.bf16.mxu0 0
    %1531 = vmatpush1.bf16.msra.mxu0 0
    %1532 = vmatprep.subr.bf16.mxu0 0
    %1533 = vmatpush1.bf16.msra.mxu0 0
    %1534 = vmatprep.subr.bf16.mxu0 0
    %1535 = vmatpush1.bf16.msra.mxu0 0
    %1536 = vmatprep.subr.bf16.mxu0 0
    %1537 = vmatpush1.bf16.msra.mxu0 0
    %1538 = vmatprep.subr.bf16.mxu0 0
    %1539 = vmatpush1.bf16.msra.mxu0 0
    %1540 = vmatprep.subr.bf16.mxu0 0
    %1541 = vmatpush1.bf16.msra.mxu0 0
    %1542 = vmatprep.subr.bf16.mxu0 0
    %1543 = vmatpush1.bf16.msra.mxu0 0
    %1544 = vmatprep.subr.bf16.mxu0 0
    %1545 = vmatpush1.bf16.msra.mxu0 0
    %1546 = vmatprep.subr.bf16.mxu0 0
    %1547 = vmatpush1.bf16.msra.mxu0 0
    %1548 = vmatprep.subr.bf16.mxu0 0
    %1549 = vmatpush1.bf16.msra.mxu0 0
    %1550 = vmatprep.subr.bf16.mxu0 0
    %1551 = vmatpush1.bf16.msra.mxu0 0
    %1552 = vmatprep.subr.bf16.mxu0 0
    %1553 = vmatpush1.bf16.msra.mxu0 0
    %1554 = vmatprep.subr.bf16.mxu0 0
    %1555 = vmatpush1.bf16.msra.mxu0 0
    %1556 = vmatprep.mubr.bf16.mxu0 0
    %1557 = vmatmul.mubr.bf16.gmra.mrb[0].mxu0 %v1518
    %v1558 = vpop.f32.mrb[0].mxu0
    %v1559 = vadd.f32 0.0, %v1558
    %v1560 = vpop.f32.mrb[0].mxu0
    %v1561 = vpop.f32.mrb[0].mxu0
    %v1562 = vpop.f32.mrb[0].mxu0
    %1563 = vdwg.mxu0
    %v1565 = vrot.slane %v1508, 3
    %1566 = vrot.lane.b32.xlu0 %v1565, 32
    %v1567 = vpop.permute.xlu0 %1566
    %v1572 = vunpack.c.l.b16 %v1509
    %v1573 = vunpack.c.l.b16 %v1510
    %v1574 = vunpack.c.l.b16 %v1511
    %v1575 = vunpack.c.l.b16 %v1512
    %v1576 = vpack.c.b16 %v1573, %v1572
    %v1577 = vpack.c.b16 %v1575, %v1574
    %v1581 = vsel %vm182, %v1567, 0
    %1583 = vmatprep.subr.bf16.mxu0 0
    %1584 = vmatpush1.bf16.msra.mxu0 %v1576
    %1585 = vmatprep.subr.bf16.mxu0 0
    %1586 = vmatpush1.bf16.msra.mxu0 %v1577
    %1587 = vmatprep.subr.bf16.mxu0 0
    %1588 = vmatpush1.bf16.msra.mxu0 0
    %1589 = vmatprep.subr.bf16.mxu0 0
    %1590 = vmatpush1.bf16.msra.mxu0 0
    %1591 = vmatprep.subr.bf16.mxu0 0
    %1592 = vmatpush1.bf16.msra.mxu0 0
    %1593 = vmatprep.subr.bf16.mxu0 0
    %1594 = vmatpush1.bf16.msra.mxu0 0
    %1595 = vmatprep.subr.bf16.mxu0 0
    %1596 = vmatpush1.bf16.msra.mxu0 0
    %1597 = vmatprep.subr.bf16.mxu0 0
    %1598 = vmatpush1.bf16.msra.mxu0 0
    %1599 = vmatprep.subr.bf16.mxu0 0
    %1600 = vmatpush1.bf16.msra.mxu0 0
    %1601 = vmatprep.subr.bf16.mxu0 0
    %1602 = vmatpush1.bf16.msra.mxu0 0
    %1603 = vmatprep.subr.bf16.mxu0 0
    %1604 = vmatpush1.bf16.msra.mxu0 0
    %1605 = vmatprep.subr.bf16.mxu0 0
    %1606 = vmatpush1.bf16.msra.mxu0 0
    %1607 = vmatprep.subr.bf16.mxu0 0
    %1608 = vmatpush1.bf16.msra.mxu0 0
    %1609 = vmatprep.subr.bf16.mxu0 0
    %1610 = vmatpush1.bf16.msra.mxu0 0
    %1611 = vmatprep.subr.bf16.mxu0 0
    %1612 = vmatpush1.bf16.msra.mxu0 0
    %1613 = vmatprep.subr.bf16.mxu0 0
    %1614 = vmatpush1.bf16.msra.mxu0 0
    %1615 = vmatprep.mubr.bf16.mxu0 0
    %1616 = vmatmul.mubr.bf16.gmra.mrb[0].mxu0 %v1581
    %v1617 = vpop.f32.mrb[0].mxu0
    %v1618 = vadd.f32 %v1559, %v1617
    %v1619 = vpop.f32.mrb[0].mxu0
    %v1620 = vpop.f32.mrb[0].mxu0
    %v1621 = vpop.f32.mrb[0].mxu0
    %1622 = vdwg.mxu0
    %v1623 = vld [vmem:[%s10] sm:$0x1]
    %v1625 = vlaneseq
    %v1626 = vshrl.u32 %v1625, 7
    %v1627 = vsub.s32 0, %v1626
    %v1628 = vrot.slane %v1623, %v1627
    %v1630 = vadd.f32 %v1618, %v1628
    %vm1631 = vcmask 58368
    %1632 = vst.msk [vmem:[#allocation11] sm:$0x3] %vm1631, %v1630
    // Predicated region
    $region62: #{tpu_custom_call.1} parent=1 // pred_check
      _
    $region63: #{tpu_custom_call.1} parent=1 // pred_check_branch
      %1634 = sbr.rel (0) target = $region65
    $region64: #{tpu_custom_call.1} parent=1 // pred_region
      %s1636 = ssub.s32 32, 32
      %1637 = vsyncadd [#allocation5], %s1636
      %s1639 = sshll.u32 [#allocation11], 4
      %s1640 = int_to_ptr.vmem [resolvable:$true] %s1639
      %1642 = dma.vmem_to_hbm [thread:$0]  %s1640, 32, %s11, [#allocation5]
    $region65: #{tpu_custom_call.1} parent=1 // pred_fallthru
      _
    // Predicated region
    $region66: #{tpu_custom_call.1} parent=1 // pred_check
      _
    $region67: #{tpu_custom_call.1} parent=1 // pred_check_branch
      %1644 = sbr.rel (0) target = $region69
    $region68: #{tpu_custom_call.1} parent=1 // pred_region
      %1645 = dma.done [#allocation5], 32
    $region69: #{tpu_custom_call.1} parent=1 // pred_fallthru
      _
    %1646 = vsyncpa [#allocation4], 1
    %1647 = vsyncpa [#allocation7], 1
    %1648 = vsyncpa [#allocation10], 1
    %1649 = vsyncpa [#allocation5], 1

</llo_original>
